<compile_context>
chip_gen: v7x
topology: tpu7x:2x2x1
jax: 0.10.0
libtpu: 0.0.40
codegen_flags: <defaults>
</compile_context>

<pallas_src>
import jax
import jax.numpy as jnp
from jax import lax
from jax.experimental import pallas as pl
from jax.experimental.pallas import tpu as pltpu


def _round_up(x, m):
    return ((x + m - 1) // m) * m


def _pad_axis(x, axis, new_size):
    pad = [(0, 0)] * x.ndim
    pad[axis] = (0, new_size - x.shape[axis])
    return jnp.pad(x, pad)


# --------------------- input projection: one big MXU matmul ---------------------
# preact = x2d @ [Wih_fwd | Wih_bwd] + [b_fwd | b_bwd]   (M = seq*batch_padded)

def _proj_kernel(x_ref, w_ref, b_ref, o_ref):
    o_ref[...] = (
        jnp.dot(x_ref[...], w_ref[...], preferred_element_type=jnp.float32)
        + b_ref[...]
    )


def input_projection(x2d, w, b, *, tm=512):
    m, k = x2d.shape
    n = w.shape[1]                       # multiple of 128 (2 * padded hidden)
    tm = min(tm, m)                      # m is a multiple of 8 (padded batch)
    return pl.pallas_call(
        _proj_kernel,
        out_shape=jax.ShapeDtypeStruct((m, n), jnp.float32),
        grid_spec=pltpu.PrefetchScalarGridSpec(
            num_scalar_prefetch=0,
            grid=(pl.cdiv(m, tm),),
            in_specs=[
                pl.BlockSpec((tm, k), lambda i: (i, 0)),
                pl.BlockSpec((k, n), lambda i: (0, 0)),
                pl.BlockSpec((1, n), lambda i: (0, 0)),
            ],
            out_specs=pl.BlockSpec((tm, n), lambda i: (i, 0)),
        ),
        compiler_params=pltpu.CompilerParams(
            dimension_semantics=("parallel",)),
    )(x2d, w, b)


# --------------------- fused bidirectional recurrence kernel ---------------------
# grid = (direction, time_block).  Only h @ Whh remains on the serial path.

def _birnn_layer_kernel(pre_ref, whh_ref, out_ref, h_ref):
    d = pl.program_id(0)                 # 0 = forward, 1 = backward
    t = pl.program_id(1)                 # time-block counter (reversed for bwd
                                         # by the index_map)

    @pl.when(t == 0)
    def _():                             # new direction -> reset hidden state
        h_ref[...] = jnp.zeros_like(h_ref)

    whh = whh_ref[0]                     # (Hp, Hp), resident for this direction
    t_blk = pre_ref.shape[0]

    def step(s, h):
        # forward walks rows 0..t_blk-1, backward walks t_blk-1..0
        row = jnp.where(d == 0, s, t_blk - 1 - s)
        h = jnp.tanh(pre_ref[row]
                     + jnp.dot(h, whh, preferred_element_type=jnp.float32))
        out_ref[row] = h.astype(out_ref.dtype)
        return h

    h_ref[...] = lax.fori_loop(0, t_blk, step, h_ref[...],
                               unroll=(t_blk <= 16))


def birnn_layer(preact, whh_stacked, *, t_blk):
    """preact: (seq, Bp, 2*Hp) fused fwd/bwd pre-activations (bias included).
    whh_stacked: (2, Hp, Hp).  Returns (seq, Bp, 2*Hp): lanes [:Hp]=fwd, [Hp:]=bwd.
    """
    seq, bp, two_hp = preact.shape
    hp = two_hp // 2
    nb = seq // t_blk
    assert nb * t_blk == seq

    def io_map(d, t):
        # fwd (d=0): time blocks 0..nb-1; bwd (d=1): nb-1..0.
        # feature-block index == direction -> lanes [d*Hp:(d+1)*Hp].
        return (d * (nb - 1) + (1 - 2 * d) * t, 0, d)

    blk_bytes = t_blk * bp * hp * 4
    whh_bytes = hp * hp * 4
    need = 2 * (2 * blk_bytes) + 2 * whh_bytes + bp * hp * 4   # dbl-buffered io + whh + h
    vmem_bytes = int(min(max(2 * need + (8 << 20), 16 << 20), 48 << 20))

    return pl.pallas_call(
        _birnn_layer_kernel,
        out_shape=jax.ShapeDtypeStruct((seq, bp, two_hp), jnp.float32),
        grid_spec=pltpu.PrefetchScalarGridSpec(
            num_scalar_prefetch=0,
            grid=(2, nb),
            in_specs=[
                pl.BlockSpec((t_blk, bp, hp), io_map),
                pl.BlockSpec((1, hp, hp), lambda d, t: (d, 0, 0)),
            ],
            out_specs=pl.BlockSpec((t_blk, bp, hp), io_map),
            scratch_shapes=[pltpu.VMEM((bp, hp), jnp.float32)],
        ),
        compiler_params=pltpu.CompilerParams(
            # direction axis is independent (-> v7x megacore), time is serial
            dimension_semantics=("parallel", "arbitrary"),
            vmem_limit_bytes=vmem_bytes,
        ),
    )(preact, whh_stacked)


def _choose_time_block(seq, bp, hp, budget_bytes=2 << 20):
    # largest divisor of seq <= 128 whose (T_blk, Bp, Hp) block fits the budget
    best = 1
    for cand in range(1, min(seq, 128) + 1):
        if seq % cand == 0 and cand * bp * hp * 4 <= budget_bytes:
            best = cand
    return best


# ------------------------------ full forward pass ------------------------------

def birnn_forward(params, token_ids):
    batch, seq = token_ids.shape
    h = params["rnn"][0]["whh_fwd"].shape[0]
    hp = _round_up(h, 128)               # lane-padded hidden
    bp = _round_up(batch, 8)             # sublane-padded batch
    t_blk = _choose_time_block(seq, bp, hp)

    # TODO(synk): embedding gather stays in plain JAX (no clean blockwise Pallas
    # equivalent for a small vocab gather).
    emb = jnp.take(params["embedding"], token_ids.T, axis=0).astype(jnp.float32)
    x = _pad_axis(emb, 1, bp)            # (seq, Bp, embed)

    for li, lp in enumerate(params["rnn"]):
        def pad_dir(wih):                # (in, h) -> (in_pad, hp), zero-padded
            w = _pad_axis(wih, 1, hp)
            if li > 0:
                # previous-layer features are laid out [fwd: hp, bwd: hp]
                wp = jnp.zeros((2 * hp, hp), w.dtype)
                wp = wp.at[:h].set(w[:h])
                wp = wp.at[hp:hp + h].set(w[h:])
                return wp
            return w

        wboth = jnp.concatenate([pad_dir(lp["wih_fwd"]), pad_dir(lp["wih_bwd"])],
                                axis=1)                       # (in_pad, 2*hp)
        bboth = jnp.concatenate([_pad_axis(lp["b_fwd"], 1, hp),
                                 _pad_axis(lp["b_bwd"], 1, hp)], axis=1)  # (1, 2*hp)
        whh = jnp.stack([_pad_axis(_pad_axis(lp["whh_fwd"], 0, hp), 1, hp),
                         _pad_axis(_pad_axis(lp["whh_bwd"], 0, hp), 1, hp)])  # (2,hp,hp)

        in_size = x.shape[-1]
        pre = input_projection(x.reshape(seq * bp, in_size), wboth, bboth)
        pre = pre.reshape(seq, bp, 2 * hp)
        x = birnn_layer(pre, whh, t_blk=t_blk)                # (seq, Bp, 2*hp)

    # encoding = [outputs[0], outputs[-1]]  -> (Bp, 4*hp)
    enc = jnp.concatenate([x[0], x[-1]], axis=-1)

    # TODO(synk): decoder Linear(4H->1)+Sigmoid left to XLA per perf review
    # (out_dim=1 is far below MXU granularity; a pallas_call is pure overhead).
    w = params["dec_w"]                                       # (4h, 1)
    w_pad = jnp.zeros((4 * hp, w.shape[1]), w.dtype)
    for i in range(4):
        w_pad = w_pad.at[i * hp:i * hp + h].set(w[i * h:(i + 1) * h])
    logits = jnp.dot(enc, w_pad, precision=lax.Precision.HIGHEST) + params["dec_b"]
    return jax.nn.sigmoid(logits)[:batch]                     # (batch, 1)


# --------------------- pure-JAX reference (HIGHEST precision) ---------------------

def birnn_reference(params, token_ids):
    x = jnp.take(params["embedding"], token_ids.T, axis=0).astype(jnp.float32)
    prec = lax.Precision.HIGHEST
    for lp in params["rnn"]:
        hidden = lp["whh_fwd"].shape[0]
        h0 = jnp.zeros((x.shape[1], hidden), jnp.float32)

        def step(wih, whh, b):
            def f(hh, xt):
                hh = jnp.tanh(jnp.dot(xt, wih, precision=prec)
                              + jnp.dot(hh, whh, precision=prec) + b)
                return hh, hh
            return f

        _, fwd = lax.scan(step(lp["wih_fwd"], lp["whh_fwd"], lp["b_fwd"]), h0, x)
        _, bwd_rev = lax.scan(step(lp["wih_bwd"], lp["whh_bwd"], lp["b_bwd"]),
                              h0, x[::-1])
        x = jnp.concatenate([fwd, bwd_rev[::-1]], axis=-1)
    enc = jnp.concatenate([x[0], x[-1]], axis=-1)
    return jax.nn.sigmoid(jnp.dot(enc, params["dec_w"], precision=prec)
                          + params["dec_b"])


# ----------------------------- deterministic params -----------------------------

def init_params(key, vocab_size, embed_size, num_hiddens, num_layers):
    keys = iter(jax.random.split(key, 8 + 8 * num_layers))
    scale = 1.0 / jnp.sqrt(num_hiddens).astype(jnp.float32)
    params = {
        "embedding": jax.random.normal(next(keys), (vocab_size, embed_size),
                                       jnp.float32),
        "rnn": [],
    }
    in_size = embed_size
    for _ in range(num_layers):
        lp = {}
        for d in ("fwd", "bwd"):
            lp[f"wih_{d}"] = jax.random.uniform(
                next(keys), (in_size, num_hiddens), jnp.float32, -scale, scale)
            lp[f"whh_{d}"] = jax.random.uniform(
                next(keys), (num_hiddens, num_hiddens), jnp.float32, -scale, scale)
            b_ih = jax.random.uniform(next(keys), (num_hiddens,), jnp.float32,
                                      -scale, scale)
            b_hh = jax.random.uniform(next(keys), (num_hiddens,), jnp.float32,
                                      -scale, scale)
            lp[f"b_{d}"] = (b_ih + b_hh).reshape(1, num_hiddens)
        params["rnn"].append(lp)
        in_size = 2 * num_hiddens
    dscale = 1.0 / jnp.sqrt(4.0 * num_hiddens).astype(jnp.float32)
    params["dec_w"] = jax.random.uniform(
        next(keys), (4 * num_hiddens, 1), jnp.float32, -dscale, dscale)
    params["dec_b"] = jax.random.uniform(
        next(keys), (1, 1), jnp.float32, -dscale, dscale)
    return params


if __name__ == "__main__":
    vocab_size, embed_size, num_hiddens, num_layers = 100, 32, 32, 2
    batch, seq = 2, 8

    key = jax.random.PRNGKey(0)
    pkey, tkey = jax.random.split(key)
    params = init_params(pkey, vocab_size, embed_size, num_hiddens, num_layers)
    token_ids = jax.random.randint(tkey, (batch, seq), 0, vocab_size, jnp.int32)

    out = jax.jit(birnn_forward)(params, token_ids)
    out = jax.block_until_ready(out)

    ref = jax.block_until_ready(birnn_reference(params, token_ids))
    assert out.shape == (batch, 1), out.shape
    assert jnp.allclose(out, ref, atol=2e-3), (out, ref)

    print("KERNEL_OK")
</pallas_src>

<mosaic_0001>
module attributes {stable_mosaic.version = 11 : i64} {
  func.func @_proj_kernel(%arg0: i32, %arg1: memref<64x32xf32, #tpu.memory_space<vmem>>, %arg2: memref<32x256xf32, #tpu.memory_space<vmem>>, %arg3: memref<1x256xf32, #tpu.memory_space<vmem>>, %arg4: memref<64x256xf32, #tpu.memory_space<vmem>>) attributes {dimension_semantics = [#tpu.dimension_semantics<parallel>], iteration_bounds = array<i64: 1>, scalar_prefetch = 0 : i64, scratch_operands = 0 : i64, tpu.core_type = #tpu.core_type<tc>, window_params = [{transform_indices = @transform_0, window_bounds = array<i64: 64, 32>}, {pipeline_mode = #tpu.pipeline_mode<synchronous>, transform_indices = @transform_1, window_bounds = array<i64: 32, 256>}, {pipeline_mode = #tpu.pipeline_mode<synchronous>, transform_indices = @transform_2, window_bounds = array<i64: 1, 256>}, {transform_indices = @transform_3, window_bounds = array<i64: 64, 256>}]} {
    %c0 = arith.constant 0 : index
    %c0_0 = arith.constant 0 : index
    %0 = vector.load %arg1[%c0, %c0_0] : memref<64x32xf32, #tpu.memory_space<vmem>>, vector<64x32xf32>
    %c0_1 = arith.constant 0 : index
    %c0_2 = arith.constant 0 : index
    %1 = vector.load %arg2[%c0_1, %c0_2] : memref<32x256xf32, #tpu.memory_space<vmem>>, vector<32x256xf32>
    %cst = arith.constant dense<0.000000e+00> : vector<64x256xf32>
    %2 = tpu.matmul %0, %1, %cst {dimension_numbers = #tpu.dot_dimension_numbers<[1], [0], [0], [1], [0, 0, 1, 1], [], []>} : vector<64x32xf32>, vector<32x256xf32>, vector<64x256xf32> -> vector<64x256xf32>
    %c0_3 = arith.constant 0 : index
    %c0_4 = arith.constant 0 : index
    %3 = vector.load %arg3[%c0_3, %c0_4] : memref<1x256xf32, #tpu.memory_space<vmem>>, vector<1x256xf32>
    %4 = vector.broadcast %3 : vector<1x256xf32> to vector<64x256xf32>
    %5 = arith.addf %2, %4 : vector<64x256xf32>
    %c0_5 = arith.constant 0 : index
    %c0_6 = arith.constant 0 : index
    %6 = vector.load %arg4[%c0_5, %c0_6] : memref<64x256xf32, #tpu.memory_space<vmem>>, vector<64x256xf32>
    tpu.vector_store %arg4[%c0_5, %c0_6], %5 {strides = array<i32>} : memref<64x256xf32, #tpu.memory_space<vmem>>, vector<64x256xf32>,
    return
  }
  func.func @transform_0(%arg0: i32) -> (i32, i32) {
    %c0_i32 = arith.constant 0 : i32
    %c0_i32_0 = arith.constant 0 : i32
    return %arg0, %c0_i32 : i32, i32
  }
  func.func @transform_1(%arg0: i32) -> (i32, i32) {
    %c0_i32 = arith.constant 0 : i32
    %c0_i32_0 = arith.constant 0 : i32
    %c0_i32_1 = arith.constant 0 : i32
    return %c0_i32, %c0_i32_0 : i32, i32
  }
  func.func @transform_2(%arg0: i32) -> (i32, i32) {
    %c0_i32 = arith.constant 0 : i32
    %c0_i32_0 = arith.constant 0 : i32
    %c0_i32_1 = arith.constant 0 : i32
    return %c0_i32, %c0_i32_0 : i32, i32
  }
  func.func @transform_3(%arg0: i32) -> (i32, i32) {
    %c0_i32 = arith.constant 0 : i32
    %c0_i32_0 = arith.constant 0 : i32
    return %arg0, %c0_i32 : i32, i32
  }
}

module attributes {stable_mosaic.version = 11 : i64} {
  func.func @_proj_kernel(%arg0: i32, %arg1: memref<64x256xf32, #tpu.memory_space<vmem>>, %arg2: memref<256x256xf32, #tpu.memory_space<vmem>>, %arg3: memref<1x256xf32, #tpu.memory_space<vmem>>, %arg4: memref<64x256xf32, #tpu.memory_space<vmem>>) attributes {dimension_semantics = [#tpu.dimension_semantics<parallel>], iteration_bounds = array<i64: 1>, scalar_prefetch = 0 : i64, scratch_operands = 0 : i64, tpu.core_type = #tpu.core_type<tc>, window_params = [{transform_indices = @transform_0, window_bounds = array<i64: 64, 256>}, {pipeline_mode = #tpu.pipeline_mode<synchronous>, transform_indices = @transform_1, window_bounds = array<i64: 256, 256>}, {pipeline_mode = #tpu.pipeline_mode<synchronous>, transform_indices = @transform_2, window_bounds = array<i64: 1, 256>}, {transform_indices = @transform_3, window_bounds = array<i64: 64, 256>}]} {
    %c0 = arith.constant 0 : index
    %c0_0 = arith.constant 0 : index
    %0 = vector.load %arg1[%c0, %c0_0] : memref<64x256xf32, #tpu.memory_space<vmem>>, vector<64x256xf32>
    %c0_1 = arith.constant 0 : index
    %c0_2 = arith.constant 0 : index
    %1 = vector.load %arg2[%c0_1, %c0_2] : memref<256x256xf32, #tpu.memory_space<vmem>>, vector<256x256xf32>
    %cst = arith.constant dense<0.000000e+00> : vector<64x256xf32>
    %2 = tpu.matmul %0, %1, %cst {dimension_numbers = #tpu.dot_dimension_numbers<[1], [0], [0], [1], [0, 0, 1, 1], [], []>} : vector<64x256xf32>, vector<256x256xf32>, vector<64x256xf32> -> vector<64x256xf32>
    %c0_3 = arith.constant 0 : index
    %c0_4 = arith.constant 0 : index
    %3 = vector.load %arg3[%c0_3, %c0_4] : memref<1x256xf32, #tpu.memory_space<vmem>>, vector<1x256xf32>
    %4 = vector.broadcast %3 : vector<1x256xf32> to vector<64x256xf32>
    %5 = arith.addf %2, %4 : vector<64x256xf32>
    %c0_5 = arith.constant 0 : index
    %c0_6 = arith.constant 0 : index
    %6 = vector.load %arg4[%c0_5, %c0_6] : memref<64x256xf32, #tpu.memory_space<vmem>>, vector<64x256xf32>
    tpu.vector_store %arg4[%c0_5, %c0_6], %5 {strides = array<i32>} : memref<64x256xf32, #tpu.memory_space<vmem>>, vector<64x256xf32>,
    return
  }
  func.func @transform_0(%arg0: i32) -> (i32, i32) {
    %c0_i32 = arith.constant 0 : i32
    %c0_i32_0 = arith.constant 0 : i32
    return %arg0, %c0_i32 : i32, i32
  }
  func.func @transform_1(%arg0: i32) -> (i32, i32) {
    %c0_i32 = arith.constant 0 : i32
    %c0_i32_0 = arith.constant 0 : i32
    %c0_i32_1 = arith.constant 0 : i32
    return %c0_i32, %c0_i32_0 : i32, i32
  }
  func.func @transform_2(%arg0: i32) -> (i32, i32) {
    %c0_i32 = arith.constant 0 : i32
    %c0_i32_0 = arith.constant 0 : i32
    %c0_i32_1 = arith.constant 0 : i32
    return %c0_i32, %c0_i32_0 : i32, i32
  }
  func.func @transform_3(%arg0: i32) -> (i32, i32) {
    %c0_i32 = arith.constant 0 : i32
    %c0_i32_0 = arith.constant 0 : i32
    return %arg0, %c0_i32 : i32, i32
  }
}

module attributes {stable_mosaic.version = 11 : i64} {
  func.func @_birnn_layer_kernel(%arg0: i32, %arg1: i32, %arg2: memref<8x8x128xf32, #tpu.memory_space<vmem>>, %arg3: memref<1x128x128xf32, #tpu.memory_space<vmem>>, %arg4: memref<8x8x128xf32, #tpu.memory_space<vmem>>, %arg5: memref<8x128xf32, #tpu.memory_space<vmem>>) attributes {dimension_semantics = [#tpu.dimension_semantics<parallel>, #tpu.dimension_semantics<arbitrary>], iteration_bounds = array<i64: 2, 1>, scalar_prefetch = 0 : i64, scratch_operands = 1 : i64, tpu.core_type = #tpu.core_type<tc>, window_params = [{transform_indices = @transform_0, window_bounds = array<i64: 8, 8, 128>}, {transform_indices = @transform_1, window_bounds = array<i64: 1, 128, 128>}, {transform_indices = @transform_2, window_bounds = array<i64: 8, 8, 128>}]} {
    %c0_i32 = arith.constant 0 : i32
    %0 = arith.cmpi eq, %arg1, %c0_i32 : i32
    %1 = arith.extui %0 : i1 to i32
    %c0_i32_0 = arith.constant 0 : i32
    %2 = arith.cmpi ne, %1, %c0_i32_0 : i32
    scf.if %2 {
      %cst_63 = arith.constant 0.000000e+00 : f32
      %111 = vector.broadcast %cst_63 : f32 to vector<8x128xf32>
      %c0_64 = arith.constant 0 : index
      %c0_65 = arith.constant 0 : index
      %112 = vector.load %arg5[%c0_64, %c0_65] : memref<8x128xf32, #tpu.memory_space<vmem>>, vector<8x128xf32>
      tpu.vector_store %arg5[%c0_64, %c0_65], %111 {strides = array<i32>} : memref<8x128xf32, #tpu.memory_space<vmem>>, vector<8x128xf32>,
    } else {
    }
    %c0 = arith.constant 0 : index
    %c0_1 = arith.constant 0 : index
    %c0_2 = arith.constant 0 : index
    %3 = vector.load %arg3[%c0, %c0_1, %c0_2] : memref<1x128x128xf32, #tpu.memory_space<vmem>>, vector<1x128x128xf32>
    %4 = vector.shape_cast %3 : vector<1x128x128xf32> to vector<128x128xf32>
    %c0_3 = arith.constant 0 : index
    %c0_4 = arith.constant 0 : index
    %5 = vector.load %arg5[%c0_3, %c0_4] : memref<8x128xf32, #tpu.memory_space<vmem>>, vector<8x128xf32>
    %c0_i32_5 = arith.constant 0 : i32
    %c0_i32_6 = arith.constant 0 : i32
    %6 = arith.cmpi eq, %arg0, %c0_i32_6 : i32
    %c7_i32 = arith.constant 7 : i32
    %7 = arith.subi %c7_i32, %c0_i32_5 : i32
    %8 = arith.select %6, %c0_i32_5, %7 : i32
    %9 = arith.index_cast %8 : i32 to index
    %c0_7 = arith.constant 0 : index
    %c0_8 = arith.constant 0 : index
    %10 = vector.load %arg2[%9, %c0_7, %c0_8] : memref<8x8x128xf32, #tpu.memory_space<vmem>>, vector<1x8x128xf32>
    %11 = vector.shape_cast %10 : vector<1x8x128xf32> to vector<8x128xf32>
    %cst = arith.constant dense<0.000000e+00> : vector<8x128xf32>
    %12 = tpu.matmul %5, %4, %cst {dimension_numbers = #tpu.dot_dimension_numbers<[1], [0], [0], [1], [0, 0, 1, 1], [], []>} : vector<8x128xf32>, vector<128x128xf32>, vector<8x128xf32> -> vector<8x128xf32>
    %13 = arith.addf %11, %12 : vector<8x128xf32>
    %14 = math.tanh %13 : vector<8x128xf32>
    %15 = arith.index_cast %8 : i32 to index
    %c0_9 = arith.constant 0 : index
    %c0_10 = arith.constant 0 : index
    %16 = vector.load %arg4[%15, %c0_9, %c0_10] : memref<8x8x128xf32, #tpu.memory_space<vmem>>, vector<1x8x128xf32>
    %17 = vector.shape_cast %16 : vector<1x8x128xf32> to vector<8x128xf32>
    %18 = vector.shape_cast %14 : vector<8x128xf32> to vector<1x8x128xf32>
    tpu.vector_store %arg4[%15, %c0_9, %c0_10], %18 {strides = array<i32>} : memref<8x8x128xf32, #tpu.memory_space<vmem>>, vector<1x8x128xf32>,
    %c1_i32 = arith.constant 1 : i32
    %c0_i32_11 = arith.constant 0 : i32
    %19 = arith.cmpi eq, %arg0, %c0_i32_11 : i32
    %c7_i32_12 = arith.constant 7 : i32
    %20 = arith.subi %c7_i32_12, %c1_i32 : i32
    %21 = arith.select %19, %c1_i32, %20 : i32
    %22 = arith.index_cast %21 : i32 to index
    %c0_13 = arith.constant 0 : index
    %c0_14 = arith.constant 0 : index
    %23 = vector.load %arg2[%22, %c0_13, %c0_14] : memref<8x8x128xf32, #tpu.memory_space<vmem>>, vector<1x8x128xf32>
    %24 = vector.shape_cast %23 : vector<1x8x128xf32> to vector<8x128xf32>
    %cst_15 = arith.constant dense<0.000000e+00> : vector<8x128xf32>
    %25 = tpu.matmul %14, %4, %cst_15 {dimension_numbers = #tpu.dot_dimension_numbers<[1], [0], [0], [1], [0, 0, 1, 1], [], []>} : vector<8x128xf32>, vector<128x128xf32>, vector<8x128xf32> -> vector<8x128xf32>
    %26 = arith.addf %24, %25 : vector<8x128xf32>
    %27 = math.tanh %26 : vector<8x128xf32>
    %28 = arith.index_cast %21 : i32 to index
    %c0_16 = arith.constant 0 : index
    %c0_17 = arith.constant 0 : index
    %29 = vector.load %arg4[%28, %c0_16, %c0_17] : memref<8x8x128xf32, #tpu.memory_space<vmem>>, vector<1x8x128xf32>
    %30 = vector.shape_cast %29 : vector<1x8x128xf32> to vector<8x128xf32>
    %31 = vector.shape_cast %27 : vector<8x128xf32> to vector<1x8x128xf32>
    tpu.vector_store %arg4[%28, %c0_16, %c0_17], %31 {strides = array<i32>} : memref<8x8x128xf32, #tpu.memory_space<vmem>>, vector<1x8x128xf32>,
    %c2_i32 = arith.constant 2 : i32
    %c0_i32_18 = arith.constant 0 : i32
    %32 = arith.cmpi eq, %arg0, %c0_i32_18 : i32
    %c7_i32_19 = arith.constant 7 : i32
    %33 = arith.subi %c7_i32_19, %c2_i32 : i32
    %34 = arith.select %32, %c2_i32, %33 : i32
    %35 = arith.index_cast %34 : i32 to index
    %c0_20 = arith.constant 0 : index
    %c0_21 = arith.constant 0 : index
    %36 = vector.load %arg2[%35, %c0_20, %c0_21] : memref<8x8x128xf32, #tpu.memory_space<vmem>>, vector<1x8x128xf32>
    %37 = vector.shape_cast %36 : vector<1x8x128xf32> to vector<8x128xf32>
    %cst_22 = arith.constant dense<0.000000e+00> : vector<8x128xf32>
    %38 = tpu.matmul %27, %4, %cst_22 {dimension_numbers = #tpu.dot_dimension_numbers<[1], [0], [0], [1], [0, 0, 1, 1], [], []>} : vector<8x128xf32>, vector<128x128xf32>, vector<8x128xf32> -> vector<8x128xf32>
    %39 = arith.addf %37, %38 : vector<8x128xf32>
    %40 = math.tanh %39 : vector<8x128xf32>
    %41 = arith.index_cast %34 : i32 to index
    %c0_23 = arith.constant 0 : index
    %c0_24 = arith.constant 0 : index
    %42 = vector.load %arg4[%41, %c0_23, %c0_24] : memref<8x8x128xf32, #tpu.memory_space<vmem>>, vector<1x8x128xf32>
    %43 = vector.shape_cast %42 : vector<1x8x128xf32> to vector<8x128xf32>
    %44 = vector.shape_cast %40 : vector<8x128xf32> to vector<1x8x128xf32>
    tpu.vector_store %arg4[%41, %c0_23, %c0_24], %44 {strides = array<i32>} : memref<8x8x128xf32, #tpu.memory_space<vmem>>, vector<1x8x128xf32>,
    %c3_i32 = arith.constant 3 : i32
    %c0_i32_25 = arith.constant 0 : i32
    %45 = arith.cmpi eq, %arg0, %c0_i32_25 : i32
    %c7_i32_26 = arith.constant 7 : i32
    %46 = arith.subi %c7_i32_26, %c3_i32 : i32
    %47 = arith.select %45, %c3_i32, %46 : i32
    %48 = arith.index_cast %47 : i32 to index
    %c0_27 = arith.constant 0 : index
    %c0_28 = arith.constant 0 : index
    %49 = vector.load %arg2[%48, %c0_27, %c0_28] : memref<8x8x128xf32, #tpu.memory_space<vmem>>, vector<1x8x128xf32>
    %50 = vector.shape_cast %49 : vector<1x8x128xf32> to vector<8x128xf32>
    %cst_29 = arith.constant dense<0.000000e+00> : vector<8x128xf32>
    %51 = tpu.matmul %40, %4, %cst_29 {dimension_numbers = #tpu.dot_dimension_numbers<[1], [0], [0], [1], [0, 0, 1, 1], [], []>} : vector<8x128xf32>, vector<128x128xf32>, vector<8x128xf32> -> vector<8x128xf32>
    %52 = arith.addf %50, %51 : vector<8x128xf32>
    %53 = math.tanh %52 : vector<8x128xf32>
    %54 = arith.index_cast %47 : i32 to index
    %c0_30 = arith.constant 0 : index
    %c0_31 = arith.constant 0 : index
    %55 = vector.load %arg4[%54, %c0_30, %c0_31] : memref<8x8x128xf32, #tpu.memory_space<vmem>>, vector<1x8x128xf32>
    %56 = vector.shape_cast %55 : vector<1x8x128xf32> to vector<8x128xf32>
    %57 = vector.shape_cast %53 : vector<8x128xf32> to vector<1x8x128xf32>
    tpu.vector_store %arg4[%54, %c0_30, %c0_31], %57 {strides = array<i32>} : memref<8x8x128xf32, #tpu.memory_space<vmem>>, vector<1x8x128xf32>,
    %c4_i32 = arith.constant 4 : i32
    %c0_i32_32 = arith.constant 0 : i32
    %58 = arith.cmpi eq, %arg0, %c0_i32_32 : i32
    %c7_i32_33 = arith.constant 7 : i32
    %59 = arith.subi %c7_i32_33, %c4_i32 : i32
    %60 = arith.select %58, %c4_i32, %59 : i32
    %61 = arith.index_cast %60 : i32 to index
    %c0_34 = arith.constant 0 : index
    %c0_35 = arith.constant 0 : index
    %62 = vector.load %arg2[%61, %c0_34, %c0_35] : memref<8x8x128xf32, #tpu.memory_space<vmem>>, vector<1x8x128xf32>
    %63 = vector.shape_cast %62 : vector<1x8x128xf32> to vector<8x128xf32>
    %cst_36 = arith.constant dense<0.000000e+00> : vector<8x128xf32>
    %64 = tpu.matmul %53, %4, %cst_36 {dimension_numbers = #tpu.dot_dimension_numbers<[1], [0], [0], [1], [0, 0, 1, 1], [], []>} : vector<8x128xf32>, vector<128x128xf32>, vector<8x128xf32> -> vector<8x128xf32>
    %65 = arith.addf %63, %64 : vector<8x128xf32>
    %66 = math.tanh %65 : vector<8x128xf32>
    %67 = arith.index_cast %60 : i32 to index
    %c0_37 = arith.constant 0 : index
    %c0_38 = arith.constant 0 : index
    %68 = vector.load %arg4[%67, %c0_37, %c0_38] : memref<8x8x128xf32, #tpu.memory_space<vmem>>, vector<1x8x128xf32>
    %69 = vector.shape_cast %68 : vector<1x8x128xf32> to vector<8x128xf32>
    %70 = vector.shape_cast %66 : vector<8x128xf32> to vector<1x8x128xf32>
    tpu.vector_store %arg4[%67, %c0_37, %c0_38], %70 {strides = array<i32>} : memref<8x8x128xf32, #tpu.memory_space<vmem>>, vector<1x8x128xf32>,
    %c5_i32 = arith.constant 5 : i32
    %c0_i32_39 = arith.constant 0 : i32
    %71 = arith.cmpi eq, %arg0, %c0_i32_39 : i32
    %c7_i32_40 = arith.constant 7 : i32
    %72 = arith.subi %c7_i32_40, %c5_i32 : i32
    %73 = arith.select %71, %c5_i32, %72 : i32
    %74 = arith.index_cast %73 : i32 to index
    %c0_41 = arith.constant 0 : index
    %c0_42 = arith.constant 0 : index
    %75 = vector.load %arg2[%74, %c0_41, %c0_42] : memref<8x8x128xf32, #tpu.memory_space<vmem>>, vector<1x8x128xf32>
    %76 = vector.shape_cast %75 : vector<1x8x128xf32> to vector<8x128xf32>
    %cst_43 = arith.constant dense<0.000000e+00> : vector<8x128xf32>
    %77 = tpu.matmul %66, %4, %cst_43 {dimension_numbers = #tpu.dot_dimension_numbers<[1], [0], [0], [1], [0, 0, 1, 1], [], []>} : vector<8x128xf32>, vector<128x128xf32>, vector<8x128xf32> -> vector<8x128xf32>
    %78 = arith.addf %76, %77 : vector<8x128xf32>
    %79 = math.tanh %78 : vector<8x128xf32>
    %80 = arith.index_cast %73 : i32 to index
    %c0_44 = arith.constant 0 : index
    %c0_45 = arith.constant 0 : index
    %81 = vector.load %arg4[%80, %c0_44, %c0_45] : memref<8x8x128xf32, #tpu.memory_space<vmem>>, vector<1x8x128xf32>
    %82 = vector.shape_cast %81 : vector<1x8x128xf32> to vector<8x128xf32>
    %83 = vector.shape_cast %79 : vector<8x128xf32> to vector<1x8x128xf32>
    tpu.vector_store %arg4[%80, %c0_44, %c0_45], %83 {strides = array<i32>} : memref<8x8x128xf32, #tpu.memory_space<vmem>>, vector<1x8x128xf32>,
    %c6_i32 = arith.constant 6 : i32
    %c0_i32_46 = arith.constant 0 : i32
    %84 = arith.cmpi eq, %arg0, %c0_i32_46 : i32
    %c7_i32_47 = arith.constant 7 : i32
    %85 = arith.subi %c7_i32_47, %c6_i32 : i32
    %86 = arith.select %84, %c6_i32, %85 : i32
    %87 = arith.index_cast %86 : i32 to index
    %c0_48 = arith.constant 0 : index
    %c0_49 = arith.constant 0 : index
    %88 = vector.load %arg2[%87, %c0_48, %c0_49] : memref<8x8x128xf32, #tpu.memory_space<vmem>>, vector<1x8x128xf32>
    %89 = vector.shape_cast %88 : vector<1x8x128xf32> to vector<8x128xf32>
    %cst_50 = arith.constant dense<0.000000e+00> : vector<8x128xf32>
    %90 = tpu.matmul %79, %4, %cst_50 {dimension_numbers = #tpu.dot_dimension_numbers<[1], [0], [0], [1], [0, 0, 1, 1], [], []>} : vector<8x128xf32>, vector<128x128xf32>, vector<8x128xf32> -> vector<8x128xf32>
    %91 = arith.addf %89, %90 : vector<8x128xf32>
    %92 = math.tanh %91 : vector<8x128xf32>
    %93 = arith.index_cast %86 : i32 to index
    %c0_51 = arith.constant 0 : index
    %c0_52 = arith.constant 0 : index
    %94 = vector.load %arg4[%93, %c0_51, %c0_52] : memref<8x8x128xf32, #tpu.memory_space<vmem>>, vector<1x8x128xf32>
    %95 = vector.shape_cast %94 : vector<1x8x128xf32> to vector<8x128xf32>
    %96 = vector.shape_cast %92 : vector<8x128xf32> to vector<1x8x128xf32>
    tpu.vector_store %arg4[%93, %c0_51, %c0_52], %96 {strides = array<i32>} : memref<8x8x128xf32, #tpu.memory_space<vmem>>, vector<1x8x128xf32>,
    %c7_i32_53 = arith.constant 7 : i32
    %c0_i32_54 = arith.constant 0 : i32
    %97 = arith.cmpi eq, %arg0, %c0_i32_54 : i32
    %c7_i32_55 = arith.constant 7 : i32
    %98 = arith.subi %c7_i32_55, %c7_i32_53 : i32
    %99 = arith.select %97, %c7_i32_53, %98 : i32
    %100 = arith.index_cast %99 : i32 to index
    %c0_56 = arith.constant 0 : index
    %c0_57 = arith.constant 0 : index
    %101 = vector.load %arg2[%100, %c0_56, %c0_57] : memref<8x8x128xf32, #tpu.memory_space<vmem>>, vector<1x8x128xf32>
    %102 = vector.shape_cast %101 : vector<1x8x128xf32> to vector<8x128xf32>
    %cst_58 = arith.constant dense<0.000000e+00> : vector<8x128xf32>
    %103 = tpu.matmul %92, %4, %cst_58 {dimension_numbers = #tpu.dot_dimension_numbers<[1], [0], [0], [1], [0, 0, 1, 1], [], []>} : vector<8x128xf32>, vector<128x128xf32>, vector<8x128xf32> -> vector<8x128xf32>
    %104 = arith.addf %102, %103 : vector<8x128xf32>
    %105 = math.tanh %104 : vector<8x128xf32>
    %106 = arith.index_cast %99 : i32 to index
    %c0_59 = arith.constant 0 : index
    %c0_60 = arith.constant 0 : index
    %107 = vector.load %arg4[%106, %c0_59, %c0_60] : memref<8x8x128xf32, #tpu.memory_space<vmem>>, vector<1x8x128xf32>
    %108 = vector.shape_cast %107 : vector<1x8x128xf32> to vector<8x128xf32>
    %109 = vector.shape_cast %105 : vector<8x128xf32> to vector<1x8x128xf32>
    tpu.vector_store %arg4[%106, %c0_59, %c0_60], %109 {strides = array<i32>} : memref<8x8x128xf32, #tpu.memory_space<vmem>>, vector<1x8x128xf32>,
    %c8_i32 = arith.constant 8 : i32
    %c0_61 = arith.constant 0 : index
    %c0_62 = arith.constant 0 : index
    %110 = vector.load %arg5[%c0_61, %c0_62] : memref<8x128xf32, #tpu.memory_space<vmem>>, vector<8x128xf32>
    tpu.vector_store %arg5[%c0_61, %c0_62], %105 {strides = array<i32>} : memref<8x128xf32, #tpu.memory_space<vmem>>, vector<8x128xf32>,
    return
  }
  func.func @transform_0(%arg0: i32, %arg1: i32) -> (i32, i32, i32) {
    %c0_i32 = arith.constant 0 : i32
    %0 = arith.muli %arg0, %c0_i32 : i32
    %c2_i32 = arith.constant 2 : i32
    %1 = arith.muli %c2_i32, %arg0 : i32
    %c1_i32 = arith.constant 1 : i32
    %2 = arith.subi %c1_i32, %1 : i32
    %3 = arith.muli %2, %arg1 : i32
    %4 = arith.addi %0, %3 : i32
    %c0_i32_0 = arith.constant 0 : i32
    %c0_i32_1 = arith.constant 0 : i32
    return %4, %c0_i32_0, %arg0 : i32, i32, i32
  }
  func.func @transform_1(%arg0: i32, %arg1: i32) -> (i32, i32, i32) {
    %c0_i32 = arith.constant 0 : i32
    %c0_i32_0 = arith.constant 0 : i32
    %c0_i32_1 = arith.constant 0 : i32
    return %arg0, %c0_i32, %c0_i32_0 : i32, i32, i32
  }
  func.func @transform_2(%arg0: i32, %arg1: i32) -> (i32, i32, i32) {
    %c0_i32 = arith.constant 0 : i32
    %0 = arith.muli %arg0, %c0_i32 : i32
    %c2_i32 = arith.constant 2 : i32
    %1 = arith.muli %c2_i32, %arg0 : i32
    %c1_i32 = arith.constant 1 : i32
    %2 = arith.subi %c1_i32, %1 : i32
    %3 = arith.muli %2, %arg1 : i32
    %4 = arith.addi %0, %3 : i32
    %c0_i32_0 = arith.constant 0 : i32
    %c0_i32_1 = arith.constant 0 : i32
    return %4, %c0_i32_0, %arg0 : i32, i32, i32
  }
}

</mosaic_0001>

<llo_original>
// kernel: birnn_forward.4
$region0: #{birnn_forward.4}
  #allocation0 [shape = 'u32[]', space=smem, size = 0x4, offset = 0x4, fixed_abs, tag = 'smem constant byte address 0x4 - core index']
  #allocation1 [shape = 'u32[144,128]{1,0:T(1,128)}', space=vmem, size = 0x12000, scoped, tag = 'internal scratch']
  %s0 = inlined_call_operand.vmem [shape: f32[64,32], index: 0, kind: input, shape index: {}]
  %s1 = inlined_call_operand.vmem [shape: f32[32,256], index: 1, kind: input, shape index: {}]
  %s2 = inlined_call_operand.vmem [shape: f32[1,256], index: 2, kind: input, shape index: {}]
  %s3 = inlined_call_operand.vmem [shape: f32[64,256], index: 3, kind: output, shape index: {}]
  %s4 = sld [smem:[#allocation0]]
  $region22: #{birnn_forward.4} parent=0
    _
  %s6 = ssub.s32 1, %s4
  %s7 = scalar_select 0, %s6, %s4
  // Predicated region
  $region2: #{birnn_forward.4} parent=0 // pred_check
    _
  $region3: #{birnn_forward.4} parent=0 // pred_check_branch
    %9 = sbr.rel (0) target = $region5
  $region4: #{birnn_forward.4} parent=0 // pred_region
    _
  $region5: #{birnn_forward.4} parent=0 // pred_fallthru
    _
  // Predicated region
  $region6: #{birnn_forward.4} parent=0 // pred_check
    _
  $region7: #{birnn_forward.4} parent=0 // pred_check_branch
    %11 = sbr.rel (0) target = $region9
  $region8: #{birnn_forward.4} parent=0 // pred_region
    _
  $region9: #{birnn_forward.4} parent=0 // pred_fallthru
    _
  // Predicated region
  $region10: #{birnn_forward.4} parent=0 // pred_check
    _
  $region11: #{birnn_forward.4} parent=0 // pred_check_branch
    %13 = sbr.rel (0) target = $region13
  $region12: #{birnn_forward.4} parent=0 // pred_region
    _
  $region13: #{birnn_forward.4} parent=0 // pred_fallthru
    _
  %v14 = vld [vmem:[%s0] sm:$0xff]
  %v15 = vld [vmem:[%s0 + $0x8] sm:$0xff]
  %v16 = vld [vmem:[%s0 + $0x10] sm:$0xff]
  %v17 = vld [vmem:[%s0 + $0x18] sm:$0xff]
  %v18 = vld [vmem:[%s0 + $0x20] sm:$0xff]
  %v19 = vld [vmem:[%s0 + $0x28] sm:$0xff]
  %v20 = vld [vmem:[%s0 + $0x30] sm:$0xff]
  %v21 = vld [vmem:[%s0 + $0x38] sm:$0xff]
  %v22 = vld [vmem:[%s1] sm:$0xff]
  %v23 = vld [vmem:[%s1 + $0x8] sm:$0xff]
  %v24 = vld [vmem:[%s1 + $0x10] sm:$0xff]
  %v25 = vld [vmem:[%s1 + $0x18] sm:$0xff]
  %v26 = vld [vmem:[%s1 + $0x20] sm:$0xff]
  %v27 = vld [vmem:[%s1 + $0x28] sm:$0xff]
  %v28 = vld [vmem:[%s1 + $0x30] sm:$0xff]
  %v29 = vld [vmem:[%s1 + $0x38] sm:$0xff]
  %v30 = vld [vmem:[%s2] sm:$0x3]
  %v32 = vlaneseq
  %v33 = vshrl.u32 %v32, 7
  %v34 = vsub.s32 0, %v33
  %v35 = vrot.slane %v30, %v34
  %v36 = vlaneseq
  %v37 = vshrl.u32 %v36, 7
  %v38 = vsub.s32 1, %v37
  %v39 = vrot.slane %v30, %v38
  %vm42 = vcmask 261120
  %v44 = vsel %vm42, %v14, 0
  %v47 = vsel %vm42, %v15, 0
  %v50 = vsel %vm42, %v16, 0
  %v53 = vsel %vm42, %v17, 0
  %v56 = vsel %vm42, %v18, 0
  %v59 = vsel %vm42, %v19, 0
  %v62 = vsel %vm42, %v20, 0
  %v65 = vsel %vm42, %v21, 0
  %67 = vmatprep.subr.mxu0 %v23
  %68 = vmatpush1.msra.mxu0 %v22
  %69 = vmatprep.subr.mxu0 %v25
  %70 = vmatpush1.msra.mxu0 %v24
  %71 = vmatprep.subr.mxu0 %v27
  %72 = vmatpush1.msra.mxu0 %v26
  %73 = vmatprep.subr.mxu0 %v29
  %74 = vmatpush1.msra.mxu0 %v28
  %75 = vmatprep.subr.mxu0 0.0
  %76 = vmatpush1.msra.mxu0 0.0
  %77 = vmatprep.subr.mxu0 0.0
  %78 = vmatpush1.msra.mxu0 0.0
  %79 = vmatprep.subr.mxu0 0.0
  %80 = vmatpush1.msra.mxu0 0.0
  %81 = vmatprep.subr.mxu0 0.0
  %82 = vmatpush1.msra.mxu0 0.0
  %83 = vmatprep.subr.mxu0 0.0
  %84 = vmatpush1.msra.mxu0 0.0
  %85 = vmatprep.subr.mxu0 0.0
  %86 = vmatpush1.msra.mxu0 0.0
  %87 = vmatprep.subr.mxu0 0.0
  %88 = vmatpush1.msra.mxu0 0.0
  %89 = vmatprep.subr.mxu0 0.0
  %90 = vmatpush1.msra.mxu0 0.0
  %91 = vmatprep.subr.mxu0 0.0
  %92 = vmatpush1.msra.mxu0 0.0
  %93 = vmatprep.subr.mxu0 0.0
  %94 = vmatpush1.msra.mxu0 0.0
  %95 = vmatprep.subr.mxu0 0.0
  %96 = vmatpush1.msra.mxu0 0.0
  %97 = vmatprep.subr.mxu0 0.0
  %98 = vmatpush1.msra.mxu0 0.0
  %99 = vmatprep.subr.mxu0 0.0
  %100 = vmatpush1.msra.mxu0 0.0
  %101 = vmatprep.subr.mxu0 0.0
  %102 = vmatpush1.msra.mxu0 0.0
  %103 = vmatprep.subr.mxu0 0.0
  %104 = vmatpush1.msra.mxu0 0.0
  %105 = vmatprep.subr.mxu0 0.0
  %106 = vmatpush1.msra.mxu0 0.0
  %107 = vmatprep.subr.mxu0 0.0
  %108 = vmatpush1.msra.mxu0 0.0
  %109 = vmatprep.subr.mxu0 0.0
  %110 = vmatpush1.msra.mxu0 0.0
  %111 = vmatprep.subr.mxu0 0.0
  %112 = vmatpush1.msra.mxu0 0.0
  %113 = vmatprep.subr.mxu0 0.0
  %114 = vmatpush1.msra.mxu0 0.0
  %115 = vmatprep.subr.mxu0 0.0
  %116 = vmatpush1.msra.mxu0 0.0
  %117 = vmatprep.subr.mxu0 0.0
  %118 = vmatpush1.msra.mxu0 0.0
  %119 = vmatprep.subr.mxu0 0.0
  %120 = vmatpush1.msra.mxu0 0.0
  %121 = vmatprep.subr.mxu0 0.0
  %122 = vmatpush1.msra.mxu0 0.0
  %123 = vmatprep.subr.mxu0 0.0
  %124 = vmatpush1.msra.mxu0 0.0
  %125 = vmatprep.subr.mxu0 0.0
  %126 = vmatpush1.msra.mxu0 0.0
  %127 = vmatprep.subr.mxu0 0.0
  %128 = vmatpush1.msra.mxu0 0.0
  %129 = vmatprep.subr.mxu0 0.0
  %130 = vmatpush1.msra.mxu0 0.0
  %131 = vmatprep.mubr.f32.mxu0 0.0
  %132 = vmatmul.mubr.f32.gmra.mrb[0].mxu0 %v44
  %v133 = vpop.f32.mrb[0].mxu0
  %v134 = vadd.f32 %v35, %v133
  %v135 = vpop.f32.mrb[0].mxu0
  %v136 = vadd.f32 %v39, %v135
  %137 = vmatprep.mubr.f32.mxu0 0.0
  %138 = vmatmul.mubr.f32.gmra.mrb[0].mxu0 %v47
  %v139 = vpop.f32.mrb[0].mxu0
  %v140 = vadd.f32 %v35, %v139
  %v141 = vpop.f32.mrb[0].mxu0
  %v142 = vadd.f32 %v39, %v141
  %143 = vmatprep.mubr.f32.mxu0 0.0
  %144 = vmatmul.mubr.f32.gmra.mrb[0].mxu0 %v50
  %v145 = vpop.f32.mrb[0].mxu0
  %v146 = vadd.f32 %v35, %v145
  %v147 = vpop.f32.mrb[0].mxu0
  %v148 = vadd.f32 %v39, %v147
  %149 = vmatprep.mubr.f32.mxu0 0.0
  %150 = vmatmul.mubr.f32.gmra.mrb[0].mxu0 %v53
  %v151 = vpop.f32.mrb[0].mxu0
  %v152 = vadd.f32 %v35, %v151
  %v153 = vpop.f32.mrb[0].mxu0
  %v154 = vadd.f32 %v39, %v153
  %155 = vmatprep.mubr.f32.mxu0 0.0
  %156 = vmatmul.mubr.f32.gmra.mrb[0].mxu0 %v56
  %v157 = vpop.f32.mrb[0].mxu0
  %v158 = vadd.f32 %v35, %v157
  %v159 = vpop.f32.mrb[0].mxu0
  %v160 = vadd.f32 %v39, %v159
  %161 = vmatprep.mubr.f32.mxu0 0.0
  %162 = vmatmul.mubr.f32.gmra.mrb[0].mxu0 %v59
  %v163 = vpop.f32.mrb[0].mxu0
  %v164 = vadd.f32 %v35, %v163
  %v165 = vpop.f32.mrb[0].mxu0
  %v166 = vadd.f32 %v39, %v165
  %167 = vmatprep.mubr.f32.mxu0 0.0
  %168 = vmatmul.mubr.f32.gmra.mrb[0].mxu0 %v62
  %v169 = vpop.f32.mrb[0].mxu0
  %v170 = vadd.f32 %v35, %v169
  %v171 = vpop.f32.mrb[0].mxu0
  %v172 = vadd.f32 %v39, %v171
  %173 = vmatprep.mubr.f32.mxu0 0.0
  %174 = vmatmul.mubr.f32.gmra.mrb[0].mxu0 %v65
  %v175 = vpop.f32.mrb[0].mxu0
  %v176 = vadd.f32 %v35, %v175
  %v177 = vpop.f32.mrb[0].mxu0
  %v178 = vadd.f32 %v39, %v177
  %179 = vdwg.mxu0
  %180 = vst [vmem:[%s3] sm:$0xff] %v134
  %181 = vst [vmem:[%s3 + $0x8] sm:$0xff] %v136
  %182 = vst [vmem:[%s3 + $0x10] sm:$0xff] %v140
  %183 = vst [vmem:[%s3 + $0x18] sm:$0xff] %v142
  %184 = vst [vmem:[%s3 + $0x20] sm:$0xff] %v146
  %185 = vst [vmem:[%s3 + $0x28] sm:$0xff] %v148
  %186 = vst [vmem:[%s3 + $0x30] sm:$0xff] %v152
  %187 = vst [vmem:[%s3 + $0x38] sm:$0xff] %v154
  %188 = vst [vmem:[%s3 + $0x40] sm:$0xff] %v158
  %189 = vst [vmem:[%s3 + $0x48] sm:$0xff] %v160
  %190 = vst [vmem:[%s3 + $0x50] sm:$0xff] %v164
  %191 = vst [vmem:[%s3 + $0x58] sm:$0xff] %v166
  %192 = vst [vmem:[%s3 + $0x60] sm:$0xff] %v170
  %193 = vst [vmem:[%s3 + $0x68] sm:$0xff] %v172
  %194 = vst [vmem:[%s3 + $0x70] sm:$0xff] %v176
  %195 = vst [vmem:[%s3 + $0x78] sm:$0xff] %v178
  // Predicated region
  $region14: #{birnn_forward.4} parent=0 // pred_check
    _
  $region15: #{birnn_forward.4} parent=0 // pred_check_branch
    %197 = sbr.rel (0) target = $region17
  $region16: #{birnn_forward.4} parent=0 // pred_region
    _
  $region17: #{birnn_forward.4} parent=0 // pred_fallthru
    _
  // Predicated region
  $region18: #{birnn_forward.4} parent=0 // pred_check
    _
  $region19: #{birnn_forward.4} parent=0 // pred_check_branch
    %199 = sbr.rel (0) target = $region21
  $region20: #{birnn_forward.4} parent=0 // pred_region
    _
  $region21: #{birnn_forward.4} parent=0 // pred_fallthru
    _

// kernel: birnn_forward.6
$region0: #{birnn_forward.6}
  #allocation0 [shape = 'u32[]', space=smem, size = 0x4, offset = 0x4, fixed_abs, tag = 'smem constant byte address 0x4 - core index']
  #allocation1 [shape = 'u32[144,128]{1,0:T(1,128)}', space=vmem, size = 0x12000, scoped, tag = 'internal scratch']
  %s0 = inlined_call_operand.vmem [shape: f32[64,256], index: 0, kind: input, shape index: {}]
  %s1 = inlined_call_operand.vmem [shape: f32[256,256], index: 1, kind: input, shape index: {}]
  %s2 = inlined_call_operand.vmem [shape: f32[1,256], index: 2, kind: input, shape index: {}]
  %s3 = inlined_call_operand.vmem [shape: f32[64,256], index: 3, kind: output, shape index: {}]
  %s4 = sld [smem:[#allocation0]]
  $region22: #{birnn_forward.6} parent=0
    _
  %s6 = ssub.s32 1, %s4
  %s7 = scalar_select 0, %s6, %s4
  // Predicated region
  $region2: #{birnn_forward.6} parent=0 // pred_check
    _
  $region3: #{birnn_forward.6} parent=0 // pred_check_branch
    %9 = sbr.rel (0) target = $region5
  $region4: #{birnn_forward.6} parent=0 // pred_region
    _
  $region5: #{birnn_forward.6} parent=0 // pred_fallthru
    _
  // Predicated region
  $region6: #{birnn_forward.6} parent=0 // pred_check
    _
  $region7: #{birnn_forward.6} parent=0 // pred_check_branch
    %11 = sbr.rel (0) target = $region9
  $region8: #{birnn_forward.6} parent=0 // pred_region
    _
  $region9: #{birnn_forward.6} parent=0 // pred_fallthru
    _
  // Predicated region
  $region10: #{birnn_forward.6} parent=0 // pred_check
    _
  $region11: #{birnn_forward.6} parent=0 // pred_check_branch
    %13 = sbr.rel (0) target = $region13
  $region12: #{birnn_forward.6} parent=0 // pred_region
    _
  $region13: #{birnn_forward.6} parent=0 // pred_fallthru
    _
  %v14 = vld [vmem:[%s0] sm:$0xff]
  %v15 = vld [vmem:[%s0 + $0x8] sm:$0xff]
  %v16 = vld [vmem:[%s0 + $0x10] sm:$0xff]
  %v17 = vld [vmem:[%s0 + $0x18] sm:$0xff]
  %v18 = vld [vmem:[%s0 + $0x20] sm:$0xff]
  %v19 = vld [vmem:[%s0 + $0x28] sm:$0xff]
  %v20 = vld [vmem:[%s0 + $0x30] sm:$0xff]
  %v21 = vld [vmem:[%s0 + $0x38] sm:$0xff]
  %v22 = vld [vmem:[%s0 + $0x40] sm:$0xff]
  %v23 = vld [vmem:[%s0 + $0x48] sm:$0xff]
  %v24 = vld [vmem:[%s0 + $0x50] sm:$0xff]
  %v25 = vld [vmem:[%s0 + $0x58] sm:$0xff]
  %v26 = vld [vmem:[%s0 + $0x60] sm:$0xff]
  %v27 = vld [vmem:[%s0 + $0x68] sm:$0xff]
  %v28 = vld [vmem:[%s0 + $0x70] sm:$0xff]
  %v29 = vld [vmem:[%s0 + $0x78] sm:$0xff]
  %v30 = vld [vmem:[%s1] sm:$0xff]
  %v31 = vld [vmem:[%s1 + $0x8] sm:$0xff]
  %v32 = vld [vmem:[%s1 + $0x10] sm:$0xff]
  %v33 = vld [vmem:[%s1 + $0x18] sm:$0xff]
  %v34 = vld [vmem:[%s1 + $0x20] sm:$0xff]
  %v35 = vld [vmem:[%s1 + $0x28] sm:$0xff]
  %v36 = vld [vmem:[%s1 + $0x30] sm:$0xff]
  %v37 = vld [vmem:[%s1 + $0x38] sm:$0xff]
  %v38 = vld [vmem:[%s1 + $0x40] sm:$0xff]
  %v39 = vld [vmem:[%s1 + $0x48] sm:$0xff]
  %v40 = vld [vmem:[%s1 + $0x50] sm:$0xff]
  %v41 = vld [vmem:[%s1 + $0x58] sm:$0xff]
  %v42 = vld [vmem:[%s1 + $0x60] sm:$0xff]
  %v43 = vld [vmem:[%s1 + $0x68] sm:$0xff]
  %v44 = vld [vmem:[%s1 + $0x70] sm:$0xff]
  %v45 = vld [vmem:[%s1 + $0x78] sm:$0xff]
  %v46 = vld [vmem:[%s1 + $0x80] sm:$0xff]
  %v47 = vld [vmem:[%s1 + $0x88] sm:$0xff]
  %v48 = vld [vmem:[%s1 + $0x90] sm:$0xff]
  %v49 = vld [vmem:[%s1 + $0x98] sm:$0xff]
  %v50 = vld [vmem:[%s1 + $0xa0] sm:$0xff]
  %v51 = vld [vmem:[%s1 + $0xa8] sm:$0xff]
  %v52 = vld [vmem:[%s1 + $0xb0] sm:$0xff]
  %v53 = vld [vmem:[%s1 + $0xb8] sm:$0xff]
  %v54 = vld [vmem:[%s1 + $0xc0] sm:$0xff]
  %v55 = vld [vmem:[%s1 + $0xc8] sm:$0xff]
  %v56 = vld [vmem:[%s1 + $0xd0] sm:$0xff]
  %v57 = vld [vmem:[%s1 + $0xd8] sm:$0xff]
  %v58 = vld [vmem:[%s1 + $0xe0] sm:$0xff]
  %v59 = vld [vmem:[%s1 + $0xe8] sm:$0xff]
  %v60 = vld [vmem:[%s1 + $0xf0] sm:$0xff]
  %v61 = vld [vmem:[%s1 + $0xf8] sm:$0xff]
  %v62 = vld [vmem:[%s1 + $0x100] sm:$0xff]
  %v63 = vld [vmem:[%s1 + $0x108] sm:$0xff]
  %v64 = vld [vmem:[%s1 + $0x110] sm:$0xff]
  %v65 = vld [vmem:[%s1 + $0x118] sm:$0xff]
  %v66 = vld [vmem:[%s1 + $0x120] sm:$0xff]
  %v67 = vld [vmem:[%s1 + $0x128] sm:$0xff]
  %v68 = vld [vmem:[%s1 + $0x130] sm:$0xff]
  %v69 = vld [vmem:[%s1 + $0x138] sm:$0xff]
  %v70 = vld [vmem:[%s1 + $0x140] sm:$0xff]
  %v71 = vld [vmem:[%s1 + $0x148] sm:$0xff]
  %v72 = vld [vmem:[%s1 + $0x150] sm:$0xff]
  %v73 = vld [vmem:[%s1 + $0x158] sm:$0xff]
  %v74 = vld [vmem:[%s1 + $0x160] sm:$0xff]
  %v75 = vld [vmem:[%s1 + $0x168] sm:$0xff]
  %v76 = vld [vmem:[%s1 + $0x170] sm:$0xff]
  %v77 = vld [vmem:[%s1 + $0x178] sm:$0xff]
  %v78 = vld [vmem:[%s1 + $0x180] sm:$0xff]
  %v79 = vld [vmem:[%s1 + $0x188] sm:$0xff]
  %v80 = vld [vmem:[%s1 + $0x190] sm:$0xff]
  %v81 = vld [vmem:[%s1 + $0x198] sm:$0xff]
  %v82 = vld [vmem:[%s1 + $0x1a0] sm:$0xff]
  %v83 = vld [vmem:[%s1 + $0x1a8] sm:$0xff]
  %v84 = vld [vmem:[%s1 + $0x1b0] sm:$0xff]
  %v85 = vld [vmem:[%s1 + $0x1b8] sm:$0xff]
  %v86 = vld [vmem:[%s1 + $0x1c0] sm:$0xff]
  %v87 = vld [vmem:[%s1 + $0x1c8] sm:$0xff]
  %v88 = vld [vmem:[%s1 + $0x1d0] sm:$0xff]
  %v89 = vld [vmem:[%s1 + $0x1d8] sm:$0xff]
  %v90 = vld [vmem:[%s1 + $0x1e0] sm:$0xff]
  %v91 = vld [vmem:[%s1 + $0x1e8] sm:$0xff]
  %v92 = vld [vmem:[%s1 + $0x1f0] sm:$0xff]
  %v93 = vld [vmem:[%s1 + $0x1f8] sm:$0xff]
  %v94 = vld [vmem:[%s2] sm:$0x3]
  %v96 = vlaneseq
  %v97 = vshrl.u32 %v96, 7
  %v98 = vsub.s32 0, %v97
  %v99 = vrot.slane %v94, %v98
  %v100 = vlaneseq
  %v101 = vshrl.u32 %v100, 7
  %v102 = vsub.s32 1, %v101
  %v103 = vrot.slane %v94, %v102
  %106 = vmatprep.subr.mxu0 %v31
  %107 = vmatpush1.msra.mxu0 %v30
  %108 = vmatprep.subr.mxu0 %v33
  %109 = vmatpush1.msra.mxu0 %v32
  %110 = vmatprep.subr.mxu0 %v35
  %111 = vmatpush1.msra.mxu0 %v34
  %112 = vmatprep.subr.mxu0 %v37
  %113 = vmatpush1.msra.mxu0 %v36
  %114 = vmatprep.subr.mxu0 %v39
  %115 = vmatpush1.msra.mxu0 %v38
  %116 = vmatprep.subr.mxu0 %v41
  %117 = vmatpush1.msra.mxu0 %v40
  %118 = vmatprep.subr.mxu0 %v43
  %119 = vmatpush1.msra.mxu0 %v42
  %120 = vmatprep.subr.mxu0 %v45
  %121 = vmatpush1.msra.mxu0 %v44
  %122 = vmatprep.subr.mxu0 %v47
  %123 = vmatpush1.msra.mxu0 %v46
  %124 = vmatprep.subr.mxu0 %v49
  %125 = vmatpush1.msra.mxu0 %v48
  %126 = vmatprep.subr.mxu0 %v51
  %127 = vmatpush1.msra.mxu0 %v50
  %128 = vmatprep.subr.mxu0 %v53
  %129 = vmatpush1.msra.mxu0 %v52
  %130 = vmatprep.subr.mxu0 %v55
  %131 = vmatpush1.msra.mxu0 %v54
  %132 = vmatprep.subr.mxu0 %v57
  %133 = vmatpush1.msra.mxu0 %v56
  %134 = vmatprep.subr.mxu0 %v59
  %135 = vmatpush1.msra.mxu0 %v58
  %136 = vmatprep.subr.mxu0 %v61
  %137 = vmatpush1.msra.mxu0 %v60
  %138 = vmatprep.subr.mxu0 %v63
  %139 = vmatpush1.msra.mxu0 %v62
  %140 = vmatprep.subr.mxu0 %v65
  %141 = vmatpush1.msra.mxu0 %v64
  %142 = vmatprep.subr.mxu0 %v67
  %143 = vmatpush1.msra.mxu0 %v66
  %144 = vmatprep.subr.mxu0 %v69
  %145 = vmatpush1.msra.mxu0 %v68
  %146 = vmatprep.subr.mxu0 %v71
  %147 = vmatpush1.msra.mxu0 %v70
  %148 = vmatprep.subr.mxu0 %v73
  %149 = vmatpush1.msra.mxu0 %v72
  %150 = vmatprep.subr.mxu0 %v75
  %151 = vmatpush1.msra.mxu0 %v74
  %152 = vmatprep.subr.mxu0 %v77
  %153 = vmatpush1.msra.mxu0 %v76
  %154 = vmatprep.subr.mxu0 %v79
  %155 = vmatpush1.msra.mxu0 %v78
  %156 = vmatprep.subr.mxu0 %v81
  %157 = vmatpush1.msra.mxu0 %v80
  %158 = vmatprep.subr.mxu0 %v83
  %159 = vmatpush1.msra.mxu0 %v82
  %160 = vmatprep.subr.mxu0 %v85
  %161 = vmatpush1.msra.mxu0 %v84
  %162 = vmatprep.subr.mxu0 %v87
  %163 = vmatpush1.msra.mxu0 %v86
  %164 = vmatprep.subr.mxu0 %v89
  %165 = vmatpush1.msra.mxu0 %v88
  %166 = vmatprep.subr.mxu0 %v91
  %167 = vmatpush1.msra.mxu0 %v90
  %168 = vmatprep.subr.mxu0 %v93
  %169 = vmatpush1.msra.mxu0 %v92
  %170 = vmatprep.mubr.f32.mxu0 %v15
  %171 = vmatmul.mubr.f32.gmra.mrb[0].mxu0 %v14
  %v172 = vpop.f32.mrb[0].mxu0
  %v173 = vadd.f32 %v99, %v172
  %v174 = vpop.f32.mrb[0].mxu0
  %v175 = vadd.f32 %v103, %v174
  %176 = vmatprep.mubr.f32.mxu0 %v17
  %177 = vmatmul.mubr.f32.gmra.mrb[0].mxu0 %v16
  %v178 = vpop.f32.mrb[0].mxu0
  %v179 = vadd.f32 %v99, %v178
  %v180 = vpop.f32.mrb[0].mxu0
  %v181 = vadd.f32 %v103, %v180
  %182 = vmatprep.mubr.f32.mxu0 %v19
  %183 = vmatmul.mubr.f32.gmra.mrb[0].mxu0 %v18
  %v184 = vpop.f32.mrb[0].mxu0
  %v185 = vadd.f32 %v99, %v184
  %v186 = vpop.f32.mrb[0].mxu0
  %v187 = vadd.f32 %v103, %v186
  %188 = vmatprep.mubr.f32.mxu0 %v21
  %189 = vmatmul.mubr.f32.gmra.mrb[0].mxu0 %v20
  %v190 = vpop.f32.mrb[0].mxu0
  %v191 = vadd.f32 %v99, %v190
  %v192 = vpop.f32.mrb[0].mxu0
  %v193 = vadd.f32 %v103, %v192
  %194 = vmatprep.mubr.f32.mxu0 %v23
  %195 = vmatmul.mubr.f32.gmra.mrb[0].mxu0 %v22
  %v196 = vpop.f32.mrb[0].mxu0
  %v197 = vadd.f32 %v99, %v196
  %v198 = vpop.f32.mrb[0].mxu0
  %v199 = vadd.f32 %v103, %v198
  %200 = vmatprep.mubr.f32.mxu0 %v25
  %201 = vmatmul.mubr.f32.gmra.mrb[0].mxu0 %v24
  %v202 = vpop.f32.mrb[0].mxu0
  %v203 = vadd.f32 %v99, %v202
  %v204 = vpop.f32.mrb[0].mxu0
  %v205 = vadd.f32 %v103, %v204
  %206 = vmatprep.mubr.f32.mxu0 %v27
  %207 = vmatmul.mubr.f32.gmra.mrb[0].mxu0 %v26
  %v208 = vpop.f32.mrb[0].mxu0
  %v209 = vadd.f32 %v99, %v208
  %v210 = vpop.f32.mrb[0].mxu0
  %v211 = vadd.f32 %v103, %v210
  %212 = vmatprep.mubr.f32.mxu0 %v29
  %213 = vmatmul.mubr.f32.gmra.mrb[0].mxu0 %v28
  %v214 = vpop.f32.mrb[0].mxu0
  %v215 = vadd.f32 %v99, %v214
  %v216 = vpop.f32.mrb[0].mxu0
  %v217 = vadd.f32 %v103, %v216
  %218 = vdwg.mxu0
  %219 = vst [vmem:[%s3] sm:$0xff] %v173
  %220 = vst [vmem:[%s3 + $0x8] sm:$0xff] %v175
  %221 = vst [vmem:[%s3 + $0x10] sm:$0xff] %v179
  %222 = vst [vmem:[%s3 + $0x18] sm:$0xff] %v181
  %223 = vst [vmem:[%s3 + $0x20] sm:$0xff] %v185
  %224 = vst [vmem:[%s3 + $0x28] sm:$0xff] %v187
  %225 = vst [vmem:[%s3 + $0x30] sm:$0xff] %v191
  %226 = vst [vmem:[%s3 + $0x38] sm:$0xff] %v193
  %227 = vst [vmem:[%s3 + $0x40] sm:$0xff] %v197
  %228 = vst [vmem:[%s3 + $0x48] sm:$0xff] %v199
  %229 = vst [vmem:[%s3 + $0x50] sm:$0xff] %v203
  %230 = vst [vmem:[%s3 + $0x58] sm:$0xff] %v205
  %231 = vst [vmem:[%s3 + $0x60] sm:$0xff] %v209
  %232 = vst [vmem:[%s3 + $0x68] sm:$0xff] %v211
  %233 = vst [vmem:[%s3 + $0x70] sm:$0xff] %v215
  %234 = vst [vmem:[%s3 + $0x78] sm:$0xff] %v217
  // Predicated region
  $region14: #{birnn_forward.6} parent=0 // pred_check
    _
  $region15: #{birnn_forward.6} parent=0 // pred_check_branch
    %236 = sbr.rel (0) target = $region17
  $region16: #{birnn_forward.6} parent=0 // pred_region
    _
  $region17: #{birnn_forward.6} parent=0 // pred_fallthru
    _
  // Predicated region
  $region18: #{birnn_forward.6} parent=0 // pred_check
    _
  $region19: #{birnn_forward.6} parent=0 // pred_check_branch
    %238 = sbr.rel (0) target = $region21
  $region20: #{birnn_forward.6} parent=0 // pred_region
    _
  $region21: #{birnn_forward.6} parent=0 // pred_fallthru
    _

// kernel: birnn_forward.5
$region0: #{birnn_forward.5}
  #allocation0 [shape = 'u32[]', space=smem, size = 0x4, offset = 0x4, fixed_abs, tag = 'smem constant byte address 0x4 - core index']
  #allocation1 [shape = 'u32[144,128]{1,0:T(1,128)}', space=vmem, size = 0x12000, scoped, tag = 'internal scratch']
  #allocation2 [shape = 'f32[8,128]{1,0:T(8,128)}', space=vmem, size = 0x1000, scoped, tag = 'scratch operand']
  %s0 = inlined_call_operand.vmem [shape: f32[8,8,256], index: 0, kind: input, shape index: {}]
  %s1 = inlined_call_operand.vmem [shape: f32[2,128,128], index: 1, kind: input, shape index: {}]
  %s2 = inlined_call_operand.vmem [shape: f32[8,8,256], index: 2, kind: output, shape index: {}]
  %s3 = sld [smem:[#allocation0]]
  $region117: #{birnn_forward.5} parent=0
    _
  %s5 = ssub.s32 1, %s3
  %s6 = scalar_select 0, %s5, %s3
  $region1: #{birnn_forward.5} parent=0
    #allocation3 [shape = 'u8[65536]{0}', space=vmem, size = 0x10000, scoped, tag = 'input window, operand 0']
    #allocation4 [shape = 'u8[65536]{0}', space=vmem, size = 0x10000, scoped, tag = 'output window, operand 0']
    loop: start=0, step=1, limit=4
    $region2: #{birnn_forward.5} parent=1 // loop_pre_header
      _
    $region3: #{birnn_forward.5} parent=1 // loop_header
      %s8 = sphi 0, %s12
      %p9 = scmp.ge.s32.totalorder %s8, 4
      %s15 = sphi 0, %s27
      %s16 = sphi 0, %s23
      %s17 = sphi 0, %s15
      %s18 = sphi 0, %s16
      %s19 = sphi 0, %s17
      %s20 = sphi 0, %s18
      %s38 = sphi 0, %s40
      %s41 = sphi 0, %s38
      %s42 = sphi 0, %s41
      %s58 = sphi 0, %s42
      %s64 = sphi 0, %s66
      %s67 = sphi 0, %s64
      %s68 = sphi 0, %s67
      %s84 = sphi 0, %s68
      %s98 = sphi 0, %s100
      %s101 = sphi 0, %s98
      %s102 = sphi 0, %s101
      %s118 = sphi 0, %s102
    $region4: #{birnn_forward.5} parent=1 // loop_header_branch
      %11 = sbr.rel (%p9) target = $region8
    $region5: #{birnn_forward.5} parent=1 // loop_body
      %s13 = ssub.s32 %s8, 1
      %s14 = ssub.s32 %s8, 2
      %s21 = sadd.s32 1, %s16
      %p22 = scmp.ge.s32.totalorder %s21, 1
      %s23 = scalar_select %p22, 0, %s21
      %s24 = sadd.s32 1, %s15
      %s25 = scalar_select %p22, %s24, %s15
      %p26 = scmp.ge.s32.totalorder %s25, 2
      %s27 = scalar_select %p26, 0, %s25
      %s28 = smul.u32 %s15, 2
      %s29 = ssub.s32 1, %s28
      %s30 = smul.u32 %s29, %s16
      %s31 = smul.u32 %s27, 2
      %s32 = ssub.s32 1, %s31
      %s33 = smul.u32 %s32, %s23
      %s34 = ssub.s32 %s30, %s33
      %s35 = ssub.s32 %s15, %s27
      %s36 = sor.u32 %s34, %s35
      %p37 = scmp.eq.s32.totalorder %s36, 0
      %s39 = sadd.s32 %s38, 1
      %s40 = scalar_select %p37, %s38, %s39
      %p43 = pneg %p37
      %p44 = scmp.eq.s32.totalorder %s8, 1
      %p45 = por %p43, %p44
      %p46 = scmp.ne.s32.totalorder %s38, %s41
      %p47 = scmp.eq.s32.totalorder %s8, 0
      %p48 = por %p46, %p47
      %p49 = scmp.ne.s32.totalorder %s38, %s41
      %p50 = scmp.eq.s32.totalorder %s13, 1
      %p51 = por %p49, %p50
      %p52 = scmp.ne.s32.totalorder %s41, %s42
      %p53 = scmp.eq.s32.totalorder %s13, 0
      %p54 = por %p52, %p53
      %p55 = scmp.ne.s32.totalorder %s41, %s42
      %p56 = scmp.eq.s32.totalorder %s14, 1
      %p57 = por %p55, %p56
      %p59 = scmp.ne.s32.totalorder %s42, %s58
      %p60 = scmp.eq.s32.totalorder %s14, 0
      %p61 = por %p59, %p60
      %s62 = ssub.s32 %s15, %s27
      %p63 = scmp.eq.s32.totalorder %s62, 0
      %s65 = sadd.s32 %s64, 1
      %s66 = scalar_select %p63, %s64, %s65
      %p69 = pneg %p63
      %p70 = scmp.eq.s32.totalorder %s8, 1
      %p71 = por %p69, %p70
      %p72 = scmp.ne.s32.totalorder %s64, %s67
      %p73 = scmp.eq.s32.totalorder %s8, 0
      %p74 = por %p72, %p73
      %p75 = scmp.ne.s32.totalorder %s64, %s67
      %p76 = scmp.eq.s32.totalorder %s13, 1
      %p77 = por %p75, %p76
      %p78 = scmp.ne.s32.totalorder %s67, %s68
      %p79 = scmp.eq.s32.totalorder %s13, 0
      %p80 = por %p78, %p79
      %p81 = scmp.ne.s32.totalorder %s67, %s68
      %p82 = scmp.eq.s32.totalorder %s14, 1
      %p83 = por %p81, %p82
      %p85 = scmp.ne.s32.totalorder %s68, %s84
      %p86 = scmp.eq.s32.totalorder %s14, 0
      %p87 = por %p85, %p86
      %s88 = smul.u32 %s15, 2
      %s89 = ssub.s32 1, %s88
      %s90 = smul.u32 %s89, %s16
      %s91 = smul.u32 %s27, 2
      %s92 = ssub.s32 1, %s91
      %s93 = smul.u32 %s92, %s23
      %s94 = ssub.s32 %s90, %s93
      %s95 = ssub.s32 %s15, %s27
      %s96 = sor.u32 %s94, %s95
      %p97 = scmp.eq.s32.totalorder %s96, 0
      %s99 = sadd.s32 %s98, 1
      %s100 = scalar_select %p97, %s98, %s99
      %p103 = pneg %p97
      %p104 = scmp.eq.s32.totalorder %s8, 1
      %p105 = por %p103, %p104
      %p106 = scmp.ne.s32.totalorder %s98, %s101
      %p107 = scmp.eq.s32.totalorder %s8, 0
      %p108 = por %p106, %p107
      %p109 = scmp.ne.s32.totalorder %s98, %s101
      %p110 = scmp.eq.s32.totalorder %s13, 1
      %p111 = por %p109, %p110
      %p112 = scmp.ne.s32.totalorder %s101, %s102
      %p113 = scmp.eq.s32.totalorder %s13, 0
      %p114 = por %p112, %p113
      %p115 = scmp.ne.s32.totalorder %s101, %s102
      %p116 = scmp.eq.s32.totalorder %s14, 1
      %p117 = por %p115, %p116
      %p119 = scmp.ne.s32.totalorder %s102, %s118
      %p120 = scmp.eq.s32.totalorder %s14, 0
      %p121 = por %p119, %p120
      %p122 = scmp.le.s32.totalorder 1, %s8
      %p123 = scmp.lt.s32.totalorder %s8, 3
      %p124 = pnand %p122, %p123
      %p125 = pneg %p124
      // Predicated region
      $region9: #{birnn_forward.5} parent=5 // pred_check
        _
      $region10: #{birnn_forward.5} parent=5 // pred_check_branch
        %127 = sbr.rel (%p124) target = $region12
      $region11: #{birnn_forward.5} parent=5 // pred_region
        %s128 = ssub.s32 %s8, 1
      $region12: #{birnn_forward.5} parent=5 // pred_fallthru
        _
      %p129 = scmp.lt.s32.totalorder %s8, 2
      // Predicated region
      $region13: #{birnn_forward.5} parent=5 // pred_check
        %p130 = pneg %p129
      $region14: #{birnn_forward.5} parent=5 // pred_check_branch
        %132 = sbr.rel (%p130) target = $region16
      $region15: #{birnn_forward.5} parent=5 // pred_region
        // Predicated region
        $region17: #{birnn_forward.5} parent=15 // pred_check
          %p133 = pneg %p48
        $region18: #{birnn_forward.5} parent=15 // pred_check_branch
          %135 = sbr.rel (%p133) target = $region20
        $region19: #{birnn_forward.5} parent=15 // pred_region
          %s136 = sand.u32 %s38, 1
          %s137 = sand.u32 %s38, 1
          %s138 = smul.addr %s137, 64
          %s139 = scalar_lea.vmem [#allocation3], %s138
          %s140 = smul.u32 %s15, 2
          %s141 = ssub.s32 1, %s140
          %s142 = smul.u32 %s141, %s16
          %s143 = smul.u32 8, %s142
          %s144 = smul.addr %s143, 2
          %s145 = sadd.s32 %s15, %s144
          %s146 = smul.addr %s145, 8
          %s147 = scalar_lea.vmem %s0, %s146
          // Predicated region
          $region21: #{birnn_forward.5} parent=19 // pred_check
            _
          $region22: #{birnn_forward.5} parent=19 // pred_check_branch
            %149 = sbr.rel (0) target = $region24
          $region23: #{birnn_forward.5} parent=19 // pred_region
            // Predicated region
            $region25: #{birnn_forward.5} parent=23 // pred_check
              _
            $region26: #{birnn_forward.5} parent=23 // pred_check_branch
              %151 = sbr.rel (0) target = $region28
            $region27: #{birnn_forward.5} parent=23 // pred_region
              // Predicated region
              $region40: #{birnn_forward.5} parent=27 // pred_check
                _
              $region41: #{birnn_forward.5} parent=27 // pred_check_branch
                %180 = sbr.rel (0) target = $region43
              $region42: #{birnn_forward.5} parent=27 // pred_region
                loop: start=0, step=1, limit=1
                $region44: #{birnn_forward.5} parent=42 // loop_pre_header
                  _
                $region45: #{birnn_forward.5} parent=42 // loop_header
                  %s182 = sphi 0, %s186
                  %p183 = scmp.ge.s32.totalorder %s182, 1
                  %s187 = sphi %s147, %s147
                  %s188 = sphi %s139, %s139
                $region46: #{birnn_forward.5} parent=42 // loop_header_branch
                  %185 = sbr.rel (%p183) target = $region50
                $region47: #{birnn_forward.5} parent=42 // loop_body
                  %v189 = vld [vmem:[%s187] sm:$0xff]
                  %190 = vst [vmem:[%s188] sm:$0xff] %v189
                  %v191 = vld [vmem:[%s187 + $0x10] sm:$0xff]
                  %192 = vst [vmem:[%s188 + $0x8] sm:$0xff] %v191
                  %v193 = vld [vmem:[%s187 + $0x20] sm:$0xff]
                  %194 = vst [vmem:[%s188 + $0x10] sm:$0xff] %v193
                  %v195 = vld [vmem:[%s187 + $0x30] sm:$0xff]
                  %196 = vst [vmem:[%s188 + $0x18] sm:$0xff] %v195
                  %v197 = vld [vmem:[%s187 + $0x40] sm:$0xff]
                  %198 = vst [vmem:[%s188 + $0x20] sm:$0xff] %v197
                  %v199 = vld [vmem:[%s187 + $0x50] sm:$0xff]
                  %200 = vst [vmem:[%s188 + $0x28] sm:$0xff] %v199
                  %v201 = vld [vmem:[%s187 + $0x60] sm:$0xff]
                  %202 = vst [vmem:[%s188 + $0x30] sm:$0xff] %v201
                  %v203 = vld [vmem:[%s187 + $0x70] sm:$0xff]
                  %204 = vst [vmem:[%s188 + $0x38] sm:$0xff] %v203
                $region48: #{birnn_forward.5} parent=42 // loop_footer
                  %s186 = sadd.s32 1, %s182
                $region49: #{birnn_forward.5} parent=42 // loop_footer_branch
                  %181 = sbr.rel target = $region45
                $region50: #{birnn_forward.5} parent=42 // loop_exit
                  _
              $region43: #{birnn_forward.5} parent=27 // pred_fallthru
                _
              // Predicated region
              $region51: #{birnn_forward.5} parent=27 // pred_check
                _
              $region52: #{birnn_forward.5} parent=27 // pred_check_branch
                %206 = sbr.rel target = $region54
              $region53: #{birnn_forward.5} parent=27 // pred_region
                _
              $region54: #{birnn_forward.5} parent=27 // pred_fallthru
                _
            $region28: #{birnn_forward.5} parent=23 // pred_fallthru
              _
            // Predicated region
            $region29: #{birnn_forward.5} parent=23 // pred_check
              _
            $region30: #{birnn_forward.5} parent=23 // pred_check_branch
              %153 = sbr.rel target = $region32
            $region31: #{birnn_forward.5} parent=23 // pred_region
              loop: start=0, step=1, limit=1
              $region33: #{birnn_forward.5} parent=31 // loop_pre_header
                _
              $region34: #{birnn_forward.5} parent=31 // loop_header
                %s156 = sphi 0, %s160
                %p157 = scmp.ge.s32.totalorder %s156, 1
                %s161 = sphi %s147, %s147
                %s162 = sphi %s139, %s139
              $region35: #{birnn_forward.5} parent=31 // loop_header_branch
                %159 = sbr.rel (%p157) target = $region39
              $region36: #{birnn_forward.5} parent=31 // loop_body
                %v163 = vld [vmem:[%s161] sm:$0xff]
                %164 = vst [vmem:[%s162] sm:$0xff] %v163
                %v165 = vld [vmem:[%s161 + $0x10] sm:$0xff]
                %166 = vst [vmem:[%s162 + $0x8] sm:$0xff] %v165
                %v167 = vld [vmem:[%s161 + $0x20] sm:$0xff]
                %168 = vst [vmem:[%s162 + $0x10] sm:$0xff] %v167
                %v169 = vld [vmem:[%s161 + $0x30] sm:$0xff]
                %170 = vst [vmem:[%s162 + $0x18] sm:$0xff] %v169
                %v171 = vld [vmem:[%s161 + $0x40] sm:$0xff]
                %172 = vst [vmem:[%s162 + $0x20] sm:$0xff] %v171
                %v173 = vld [vmem:[%s161 + $0x50] sm:$0xff]
                %174 = vst [vmem:[%s162 + $0x28] sm:$0xff] %v173
                %v175 = vld [vmem:[%s161 + $0x60] sm:$0xff]
                %176 = vst [vmem:[%s162 + $0x30] sm:$0xff] %v175
                %v177 = vld [vmem:[%s161 + $0x70] sm:$0xff]
                %178 = vst [vmem:[%s162 + $0x38] sm:$0xff] %v177
              $region37: #{birnn_forward.5} parent=31 // loop_footer
                %s160 = sadd.s32 1, %s156
              $region38: #{birnn_forward.5} parent=31 // loop_footer_branch
                %155 = sbr.rel target = $region34
              $region39: #{birnn_forward.5} parent=31 // loop_exit
                _
            $region32: #{birnn_forward.5} parent=23 // pred_fallthru
              _
          $region24: #{birnn_forward.5} parent=19 // pred_fallthru
            _
          %207 = vnop
        $region20: #{birnn_forward.5} parent=15 // pred_fallthru
          _
        // Predicated region
        $region55: #{birnn_forward.5} parent=15 // pred_check
          %p208 = pneg %p74
        $region56: #{birnn_forward.5} parent=15 // pred_check_branch
          %210 = sbr.rel (%p208) target = $region58
        $region57: #{birnn_forward.5} parent=15 // pred_region
          %p211 = scmp.lt.s32.totalorder %s15, 1
          %s212 = scalar_select %p211, %s15, 1
          %s213 = smul.addr %s212, 16
          %s214 = smul.addr %s213, 8
          %s215 = scalar_lea.vmem %s1, %s214
        $region58: #{birnn_forward.5} parent=15 // pred_fallthru
          _
      $region16: #{birnn_forward.5} parent=5 // pred_fallthru
        _
      %p216 = scmp.le.s32.totalorder 1, %s8
      %p217 = scmp.lt.s32.totalorder %s8, 3
      %p218 = pnand %p216, %p217
      %p219 = pneg %p218
      // Predicated region
      $region59: #{birnn_forward.5} parent=5 // pred_check
        _
      $region60: #{birnn_forward.5} parent=5 // pred_check_branch
        %221 = sbr.rel (%p218) target = $region62
      $region61: #{birnn_forward.5} parent=5 // pred_region
        %s222 = ssub.s32 %s8, 1
        %s223 = sand.u32 %s41, 1
        %s224 = sand.u32 %s41, 1
        %s225 = smul.addr %s224, 64
        %s226 = scalar_lea.vmem [#allocation3], %s225
        // Predicated region
        $region63: #{birnn_forward.5} parent=61 // pred_check
          %p227 = pneg %p54
        $region64: #{birnn_forward.5} parent=61 // pred_check_branch
          %229 = sbr.rel (%p227) target = $region66
        $region65: #{birnn_forward.5} parent=61 // pred_region
          _
        $region66: #{birnn_forward.5} parent=61 // pred_fallthru
          _
        %s230 = sand.u32 %s41, 1
        %s231 = sand.u32 %s41, 1
        %s232 = smul.addr %s231, 64
        %s233 = scalar_lea.vmem [#allocation3], %s232
        %p234 = pneg %p54
        %p235 = pneg %p51
        %p236 = scmp.lt.s32.totalorder %s17, 1
        %s237 = scalar_select %p236, %s17, 1
        %s238 = smul.addr %s237, 16
        %s239 = smul.addr %s238, 8
        %s240 = scalar_lea.vmem %s1, %s239
        %p241 = pneg %p80
        %p242 = pneg %p77
        %p243 = pneg %p114
        %p244 = pneg %p111
        %s245 = sand.u32 %s101, 1
        %s246 = sand.u32 %s101, 1
        %s247 = smul.addr %s246, 64
        %s248 = scalar_lea.vmem [#allocation4], %s247
        %s249 = smul.u32 %s17, 2
        %s250 = ssub.s32 1, %s249
        %s251 = smul.u32 %s250, %s18
        %s252 = smul.u32 8, %s251
        %p253 = scmp.lt.s32.totalorder %s17, 1
        %s254 = scalar_select %p253, %s17, 1
        %s255 = smul.addr %s254, 16
        %s256 = smul.addr %s255, 8
        %s257 = scalar_lea.vmem %s1, %s256
        %s258 = smul.u32 %s17, 2
        %s259 = ssub.s32 1, %s258
        %s260 = smul.u32 %s259, %s18
        %s261 = smul.u32 8, %s260
        %p262 = scmp.eq.s32.totalorder %s18, 0
        // Predicated region
        $region67: #{birnn_forward.5} parent=61 // pred_check
          %p263 = pneg %p262
        $region68: #{birnn_forward.5} parent=61 // pred_check_branch
          %265 = sbr.rel (%p263) target = $region70
        $region69: #{birnn_forward.5} parent=61 // pred_region
          %266 = vst [vmem:[#allocation2] sm:$0xff] 0.0
        $region70: #{birnn_forward.5} parent=61 // pred_fallthru
          _
        %v267 = vld [vmem:[%s257] sm:$0xff]
        %v268 = vld [vmem:[%s257 + $0x8] sm:$0xff]
        %v269 = vld [vmem:[%s257 + $0x10] sm:$0xff]
        %v270 = vld [vmem:[%s257 + $0x18] sm:$0xff]
        %v271 = vld [vmem:[%s257 + $0x20] sm:$0xff]
        %v272 = vld [vmem:[%s257 + $0x28] sm:$0xff]
        %v273 = vld [vmem:[%s257 + $0x30] sm:$0xff]
        %v274 = vld [vmem:[%s257 + $0x38] sm:$0xff]
        %v275 = vld [vmem:[%s257 + $0x40] sm:$0xff]
        %v276 = vld [vmem:[%s257 + $0x48] sm:$0xff]
        %v277 = vld [vmem:[%s257 + $0x50] sm:$0xff]
        %v278 = vld [vmem:[%s257 + $0x58] sm:$0xff]
        %v279 = vld [vmem:[%s257 + $0x60] sm:$0xff]
        %v280 = vld [vmem:[%s257 + $0x68] sm:$0xff]
        %v281 = vld [vmem:[%s257 + $0x70] sm:$0xff]
        %v282 = vld [vmem:[%s257 + $0x78] sm:$0xff]
        %v283 = vld [vmem:[#allocation2] sm:$0xff]
        %p284 = scmp.eq.s32.totalorder %s17, 0
        %s285 = scalar_select %p284, 0, 7
        %s286 = smul.u32 %s285, 8
        %s287 = scalar_lea.vmem %s226, %s286 [#allocation3]
        %v288 = vld [vmem:[%s287] sm:$0xff]
        %289 = vmatprep.subr.mxu0 0.0
        %290 = vmatpush1.msra.mxu0 %v267
        %291 = vmatprep.subr.mxu0 0.0
        %292 = vmatpush1.msra.mxu0 %v268
        %293 = vmatprep.subr.mxu0 0.0
        %294 = vmatpush1.msra.mxu0 %v269
        %295 = vmatprep.subr.mxu0 0.0
        %296 = vmatpush1.msra.mxu0 %v270
        %297 = vmatprep.subr.mxu0 0.0
        %298 = vmatpush1.msra.mxu0 %v271
        %299 = vmatprep.subr.mxu0 0.0
        %300 = vmatpush1.msra.mxu0 %v272
        %301 = vmatprep.subr.mxu0 0.0
        %302 = vmatpush1.msra.mxu0 %v273
        %303 = vmatprep.subr.mxu0 0.0
        %304 = vmatpush1.msra.mxu0 %v274
        %305 = vmatprep.subr.mxu0 0.0
        %306 = vmatpush1.msra.mxu0 %v275
        %307 = vmatprep.subr.mxu0 0.0
        %308 = vmatpush1.msra.mxu0 %v276
        %309 = vmatprep.subr.mxu0 0.0
        %310 = vmatpush1.msra.mxu0 %v277
        %311 = vmatprep.subr.mxu0 0.0
        %312 = vmatpush1.msra.mxu0 %v278
        %313 = vmatprep.subr.mxu0 0.0
        %314 = vmatpush1.msra.mxu0 %v279
        %315 = vmatprep.subr.mxu0 0.0
        %316 = vmatpush1.msra.mxu0 %v280
        %317 = vmatprep.subr.mxu0 0.0
        %318 = vmatpush1.msra.mxu0 %v281
        %319 = vmatprep.subr.mxu0 0.0
        %320 = vmatpush1.msra.mxu0 %v282
        %321 = vmatprep.subr.mxu0 0.0
        %322 = vmatpush1.msra.mxu0 0.0
        %323 = vmatprep.subr.mxu0 0.0
        %324 = vmatpush1.msra.mxu0 0.0
        %325 = vmatprep.subr.mxu0 0.0
        %326 = vmatpush1.msra.mxu0 0.0
        %327 = vmatprep.subr.mxu0 0.0
        %328 = vmatpush1.msra.mxu0 0.0
        %329 = vmatprep.subr.mxu0 0.0
        %330 = vmatpush1.msra.mxu0 0.0
        %331 = vmatprep.subr.mxu0 0.0
        %332 = vmatpush1.msra.mxu0 0.0
        %333 = vmatprep.subr.mxu0 0.0
        %334 = vmatpush1.msra.mxu0 0.0
        %335 = vmatprep.subr.mxu0 0.0
        %336 = vmatpush1.msra.mxu0 0.0
        %337 = vmatprep.subr.mxu0 0.0
        %338 = vmatpush1.msra.mxu0 0.0
        %339 = vmatprep.subr.mxu0 0.0
        %340 = vmatpush1.msra.mxu0 0.0
        %341 = vmatprep.subr.mxu0 0.0
        %342 = vmatpush1.msra.mxu0 0.0
        %343 = vmatprep.subr.mxu0 0.0
        %344 = vmatpush1.msra.mxu0 0.0
        %345 = vmatprep.subr.mxu0 0.0
        %346 = vmatpush1.msra.mxu0 0.0
        %347 = vmatprep.subr.mxu0 0.0
        %348 = vmatpush1.msra.mxu0 0.0
        %349 = vmatprep.subr.mxu0 0.0
        %350 = vmatpush1.msra.mxu0 0.0
        %351 = vmatprep.subr.mxu0 0.0
        %352 = vmatpush1.msra.mxu0 0.0
        %353 = vmatprep.mubr.f32.mxu0 0.0
        %354 = vmatmul.mubr.f32.gmra.mrb[0].mxu0 %v283
        %v355 = vpop.f32.mrb[0].mxu0
        %v356 = vadd.f32 0.0, %v355
        %v357 = vpop.f32.mrb[0].mxu0
        %358 = vdwg.mxu0
        %v359 = vadd.f32 %v288, %v356
        %v360 = vtanh.pop %v359
        %s361 = scalar_lea.vmem %s248, %s286 [#allocation4]
        %362 = vst [vmem:[%s361] sm:$0xff] %v360
        %s363 = scalar_select %p284, 1, 6
        %s364 = smul.u32 %s363, 8
        %s365 = scalar_lea.vmem %s226, %s364 [#allocation3]
        %v366 = vld [vmem:[%s365] sm:$0xff]
        %367 = vmatprep.subr.mxu0 0.0
        %368 = vmatpush1.msra.mxu0 %v267
        %369 = vmatprep.subr.mxu0 0.0
        %370 = vmatpush1.msra.mxu0 %v268
        %371 = vmatprep.subr.mxu0 0.0
        %372 = vmatpush1.msra.mxu0 %v269
        %373 = vmatprep.subr.mxu0 0.0
        %374 = vmatpush1.msra.mxu0 %v270
        %375 = vmatprep.subr.mxu0 0.0
        %376 = vmatpush1.msra.mxu0 %v271
        %377 = vmatprep.subr.mxu0 0.0
        %378 = vmatpush1.msra.mxu0 %v272
        %379 = vmatprep.subr.mxu0 0.0
        %380 = vmatpush1.msra.mxu0 %v273
        %381 = vmatprep.subr.mxu0 0.0
        %382 = vmatpush1.msra.mxu0 %v274
        %383 = vmatprep.subr.mxu0 0.0
        %384 = vmatpush1.msra.mxu0 %v275
        %385 = vmatprep.subr.mxu0 0.0
        %386 = vmatpush1.msra.mxu0 %v276
        %387 = vmatprep.subr.mxu0 0.0
        %388 = vmatpush1.msra.mxu0 %v277
        %389 = vmatprep.subr.mxu0 0.0
        %390 = vmatpush1.msra.mxu0 %v278
        %391 = vmatprep.subr.mxu0 0.0
        %392 = vmatpush1.msra.mxu0 %v279
        %393 = vmatprep.subr.mxu0 0.0
        %394 = vmatpush1.msra.mxu0 %v280
        %395 = vmatprep.subr.mxu0 0.0
        %396 = vmatpush1.msra.mxu0 %v281
        %397 = vmatprep.subr.mxu0 0.0
        %398 = vmatpush1.msra.mxu0 %v282
        %399 = vmatprep.subr.mxu0 0.0
        %400 = vmatpush1.msra.mxu0 0.0
        %401 = vmatprep.subr.mxu0 0.0
        %402 = vmatpush1.msra.mxu0 0.0
        %403 = vmatprep.subr.mxu0 0.0
        %404 = vmatpush1.msra.mxu0 0.0
        %405 = vmatprep.subr.mxu0 0.0
        %406 = vmatpush1.msra.mxu0 0.0
        %407 = vmatprep.subr.mxu0 0.0
        %408 = vmatpush1.msra.mxu0 0.0
        %409 = vmatprep.subr.mxu0 0.0
        %410 = vmatpush1.msra.mxu0 0.0
        %411 = vmatprep.subr.mxu0 0.0
        %412 = vmatpush1.msra.mxu0 0.0
        %413 = vmatprep.subr.mxu0 0.0
        %414 = vmatpush1.msra.mxu0 0.0
        %415 = vmatprep.subr.mxu0 0.0
        %416 = vmatpush1.msra.mxu0 0.0
        %417 = vmatprep.subr.mxu0 0.0
        %418 = vmatpush1.msra.mxu0 0.0
        %419 = vmatprep.subr.mxu0 0.0
        %420 = vmatpush1.msra.mxu0 0.0
        %421 = vmatprep.subr.mxu0 0.0
        %422 = vmatpush1.msra.mxu0 0.0
        %423 = vmatprep.subr.mxu0 0.0
        %424 = vmatpush1.msra.mxu0 0.0
        %425 = vmatprep.subr.mxu0 0.0
        %426 = vmatpush1.msra.mxu0 0.0
        %427 = vmatprep.subr.mxu0 0.0
        %428 = vmatpush1.msra.mxu0 0.0
        %429 = vmatprep.subr.mxu0 0.0
        %430 = vmatpush1.msra.mxu0 0.0
        %431 = vmatprep.mubr.f32.mxu0 0.0
        %432 = vmatmul.mubr.f32.gmra.mrb[0].mxu0 %v360
        %v433 = vpop.f32.mrb[0].mxu0
        %v434 = vadd.f32 0.0, %v433
        %v435 = vpop.f32.mrb[0].mxu0
        %436 = vdwg.mxu0
        %v437 = vadd.f32 %v366, %v434
        %v438 = vtanh.pop %v437
        %s439 = scalar_lea.vmem %s248, %s364 [#allocation4]
        %440 = vst [vmem:[%s439] sm:$0xff] %v438
        %s441 = scalar_select %p284, 2, 5
        %s442 = smul.u32 %s441, 8
        %s443 = scalar_lea.vmem %s226, %s442 [#allocation3]
        %v444 = vld [vmem:[%s443] sm:$0xff]
        %445 = vmatprep.subr.mxu0 0.0
        %446 = vmatpush1.msra.mxu0 %v267
        %447 = vmatprep.subr.mxu0 0.0
        %448 = vmatpush1.msra.mxu0 %v268
        %449 = vmatprep.subr.mxu0 0.0
        %450 = vmatpush1.msra.mxu0 %v269
        %451 = vmatprep.subr.mxu0 0.0
        %452 = vmatpush1.msra.mxu0 %v270
        %453 = vmatprep.subr.mxu0 0.0
        %454 = vmatpush1.msra.mxu0 %v271
        %455 = vmatprep.subr.mxu0 0.0
        %456 = vmatpush1.msra.mxu0 %v272
        %457 = vmatprep.subr.mxu0 0.0
        %458 = vmatpush1.msra.mxu0 %v273
        %459 = vmatprep.subr.mxu0 0.0
        %460 = vmatpush1.msra.mxu0 %v274
        %461 = vmatprep.subr.mxu0 0.0
        %462 = vmatpush1.msra.mxu0 %v275
        %463 = vmatprep.subr.mxu0 0.0
        %464 = vmatpush1.msra.mxu0 %v276
        %465 = vmatprep.subr.mxu0 0.0
        %466 = vmatpush1.msra.mxu0 %v277
        %467 = vmatprep.subr.mxu0 0.0
        %468 = vmatpush1.msra.mxu0 %v278
        %469 = vmatprep.subr.mxu0 0.0
        %470 = vmatpush1.msra.mxu0 %v279
        %471 = vmatprep.subr.mxu0 0.0
        %472 = vmatpush1.msra.mxu0 %v280
        %473 = vmatprep.subr.mxu0 0.0
        %474 = vmatpush1.msra.mxu0 %v281
        %475 = vmatprep.subr.mxu0 0.0
        %476 = vmatpush1.msra.mxu0 %v282
        %477 = vmatprep.subr.mxu0 0.0
        %478 = vmatpush1.msra.mxu0 0.0
        %479 = vmatprep.subr.mxu0 0.0
        %480 = vmatpush1.msra.mxu0 0.0
        %481 = vmatprep.subr.mxu0 0.0
        %482 = vmatpush1.msra.mxu0 0.0
        %483 = vmatprep.subr.mxu0 0.0
        %484 = vmatpush1.msra.mxu0 0.0
        %485 = vmatprep.subr.mxu0 0.0
        %486 = vmatpush1.msra.mxu0 0.0
        %487 = vmatprep.subr.mxu0 0.0
        %488 = vmatpush1.msra.mxu0 0.0
        %489 = vmatprep.subr.mxu0 0.0
        %490 = vmatpush1.msra.mxu0 0.0
        %491 = vmatprep.subr.mxu0 0.0
        %492 = vmatpush1.msra.mxu0 0.0
        %493 = vmatprep.subr.mxu0 0.0
        %494 = vmatpush1.msra.mxu0 0.0
        %495 = vmatprep.subr.mxu0 0.0
        %496 = vmatpush1.msra.mxu0 0.0
        %497 = vmatprep.subr.mxu0 0.0
        %498 = vmatpush1.msra.mxu0 0.0
        %499 = vmatprep.subr.mxu0 0.0
        %500 = vmatpush1.msra.mxu0 0.0
        %501 = vmatprep.subr.mxu0 0.0
        %502 = vmatpush1.msra.mxu0 0.0
        %503 = vmatprep.subr.mxu0 0.0
        %504 = vmatpush1.msra.mxu0 0.0
        %505 = vmatprep.subr.mxu0 0.0
        %506 = vmatpush1.msra.mxu0 0.0
        %507 = vmatprep.subr.mxu0 0.0
        %508 = vmatpush1.msra.mxu0 0.0
        %509 = vmatprep.mubr.f32.mxu0 0.0
        %510 = vmatmul.mubr.f32.gmra.mrb[0].mxu0 %v438
        %v511 = vpop.f32.mrb[0].mxu0
        %v512 = vadd.f32 0.0, %v511
        %v513 = vpop.f32.mrb[0].mxu0
        %514 = vdwg.mxu0
        %v515 = vadd.f32 %v444, %v512
        %v516 = vtanh.pop %v515
        %s517 = scalar_lea.vmem %s248, %s442 [#allocation4]
        %518 = vst [vmem:[%s517] sm:$0xff] %v516
        %s519 = scalar_select %p284, 3, 4
        %s520 = smul.u32 %s519, 8
        %s521 = scalar_lea.vmem %s226, %s520 [#allocation3]
        %v522 = vld [vmem:[%s521] sm:$0xff]
        %523 = vmatprep.subr.mxu0 0.0
        %524 = vmatpush1.msra.mxu0 %v267
        %525 = vmatprep.subr.mxu0 0.0
        %526 = vmatpush1.msra.mxu0 %v268
        %527 = vmatprep.subr.mxu0 0.0
        %528 = vmatpush1.msra.mxu0 %v269
        %529 = vmatprep.subr.mxu0 0.0
        %530 = vmatpush1.msra.mxu0 %v270
        %531 = vmatprep.subr.mxu0 0.0
        %532 = vmatpush1.msra.mxu0 %v271
        %533 = vmatprep.subr.mxu0 0.0
        %534 = vmatpush1.msra.mxu0 %v272
        %535 = vmatprep.subr.mxu0 0.0
        %536 = vmatpush1.msra.mxu0 %v273
        %537 = vmatprep.subr.mxu0 0.0
        %538 = vmatpush1.msra.mxu0 %v274
        %539 = vmatprep.subr.mxu0 0.0
        %540 = vmatpush1.msra.mxu0 %v275
        %541 = vmatprep.subr.mxu0 0.0
        %542 = vmatpush1.msra.mxu0 %v276
        %543 = vmatprep.subr.mxu0 0.0
        %544 = vmatpush1.msra.mxu0 %v277
        %545 = vmatprep.subr.mxu0 0.0
        %546 = vmatpush1.msra.mxu0 %v278
        %547 = vmatprep.subr.mxu0 0.0
        %548 = vmatpush1.msra.mxu0 %v279
        %549 = vmatprep.subr.mxu0 0.0
        %550 = vmatpush1.msra.mxu0 %v280
        %551 = vmatprep.subr.mxu0 0.0
        %552 = vmatpush1.msra.mxu0 %v281
        %553 = vmatprep.subr.mxu0 0.0
        %554 = vmatpush1.msra.mxu0 %v282
        %555 = vmatprep.subr.mxu0 0.0
        %556 = vmatpush1.msra.mxu0 0.0
        %557 = vmatprep.subr.mxu0 0.0
        %558 = vmatpush1.msra.mxu0 0.0
        %559 = vmatprep.subr.mxu0 0.0
        %560 = vmatpush1.msra.mxu0 0.0
        %561 = vmatprep.subr.mxu0 0.0
        %562 = vmatpush1.msra.mxu0 0.0
        %563 = vmatprep.subr.mxu0 0.0
        %564 = vmatpush1.msra.mxu0 0.0
        %565 = vmatprep.subr.mxu0 0.0
        %566 = vmatpush1.msra.mxu0 0.0
        %567 = vmatprep.subr.mxu0 0.0
        %568 = vmatpush1.msra.mxu0 0.0
        %569 = vmatprep.subr.mxu0 0.0
        %570 = vmatpush1.msra.mxu0 0.0
        %571 = vmatprep.subr.mxu0 0.0
        %572 = vmatpush1.msra.mxu0 0.0
        %573 = vmatprep.subr.mxu0 0.0
        %574 = vmatpush1.msra.mxu0 0.0
        %575 = vmatprep.subr.mxu0 0.0
        %576 = vmatpush1.msra.mxu0 0.0
        %577 = vmatprep.subr.mxu0 0.0
        %578 = vmatpush1.msra.mxu0 0.0
        %579 = vmatprep.subr.mxu0 0.0
        %580 = vmatpush1.msra.mxu0 0.0
        %581 = vmatprep.subr.mxu0 0.0
        %582 = vmatpush1.msra.mxu0 0.0
        %583 = vmatprep.subr.mxu0 0.0
        %584 = vmatpush1.msra.mxu0 0.0
        %585 = vmatprep.subr.mxu0 0.0
        %586 = vmatpush1.msra.mxu0 0.0
        %587 = vmatprep.mubr.f32.mxu0 0.0
        %588 = vmatmul.mubr.f32.gmra.mrb[0].mxu0 %v516
        %v589 = vpop.f32.mrb[0].mxu0
        %v590 = vadd.f32 0.0, %v589
        %v591 = vpop.f32.mrb[0].mxu0
        %592 = vdwg.mxu0
        %v593 = vadd.f32 %v522, %v590
        %v594 = vtanh.pop %v593
        %s595 = scalar_lea.vmem %s248, %s520 [#allocation4]
        %596 = vst [vmem:[%s595] sm:$0xff] %v594
        %s597 = scalar_select %p284, 4, 3
        %s598 = smul.u32 %s597, 8
        %s599 = scalar_lea.vmem %s226, %s598 [#allocation3]
        %v600 = vld [vmem:[%s599] sm:$0xff]
        %601 = vmatprep.subr.mxu0 0.0
        %602 = vmatpush1.msra.mxu0 %v267
        %603 = vmatprep.subr.mxu0 0.0
        %604 = vmatpush1.msra.mxu0 %v268
        %605 = vmatprep.subr.mxu0 0.0
        %606 = vmatpush1.msra.mxu0 %v269
        %607 = vmatprep.subr.mxu0 0.0
        %608 = vmatpush1.msra.mxu0 %v270
        %609 = vmatprep.subr.mxu0 0.0
        %610 = vmatpush1.msra.mxu0 %v271
        %611 = vmatprep.subr.mxu0 0.0
        %612 = vmatpush1.msra.mxu0 %v272
        %613 = vmatprep.subr.mxu0 0.0
        %614 = vmatpush1.msra.mxu0 %v273
        %615 = vmatprep.subr.mxu0 0.0
        %616 = vmatpush1.msra.mxu0 %v274
        %617 = vmatprep.subr.mxu0 0.0
        %618 = vmatpush1.msra.mxu0 %v275
        %619 = vmatprep.subr.mxu0 0.0
        %620 = vmatpush1.msra.mxu0 %v276
        %621 = vmatprep.subr.mxu0 0.0
        %622 = vmatpush1.msra.mxu0 %v277
        %623 = vmatprep.subr.mxu0 0.0
        %624 = vmatpush1.msra.mxu0 %v278
        %625 = vmatprep.subr.mxu0 0.0
        %626 = vmatpush1.msra.mxu0 %v279
        %627 = vmatprep.subr.mxu0 0.0
        %628 = vmatpush1.msra.mxu0 %v280
        %629 = vmatprep.subr.mxu0 0.0
        %630 = vmatpush1.msra.mxu0 %v281
        %631 = vmatprep.subr.mxu0 0.0
        %632 = vmatpush1.msra.mxu0 %v282
        %633 = vmatprep.subr.mxu0 0.0
        %634 = vmatpush1.msra.mxu0 0.0
        %635 = vmatprep.subr.mxu0 0.0
        %636 = vmatpush1.msra.mxu0 0.0
        %637 = vmatprep.subr.mxu0 0.0
        %638 = vmatpush1.msra.mxu0 0.0
        %639 = vmatprep.subr.mxu0 0.0
        %640 = vmatpush1.msra.mxu0 0.0
        %641 = vmatprep.subr.mxu0 0.0
        %642 = vmatpush1.msra.mxu0 0.0
        %643 = vmatprep.subr.mxu0 0.0
        %644 = vmatpush1.msra.mxu0 0.0
        %645 = vmatprep.subr.mxu0 0.0
        %646 = vmatpush1.msra.mxu0 0.0
        %647 = vmatprep.subr.mxu0 0.0
        %648 = vmatpush1.msra.mxu0 0.0
        %649 = vmatprep.subr.mxu0 0.0
        %650 = vmatpush1.msra.mxu0 0.0
        %651 = vmatprep.subr.mxu0 0.0
        %652 = vmatpush1.msra.mxu0 0.0
        %653 = vmatprep.subr.mxu0 0.0
        %654 = vmatpush1.msra.mxu0 0.0
        %655 = vmatprep.subr.mxu0 0.0
        %656 = vmatpush1.msra.mxu0 0.0
        %657 = vmatprep.subr.mxu0 0.0
        %658 = vmatpush1.msra.mxu0 0.0
        %659 = vmatprep.subr.mxu0 0.0
        %660 = vmatpush1.msra.mxu0 0.0
        %661 = vmatprep.subr.mxu0 0.0
        %662 = vmatpush1.msra.mxu0 0.0
        %663 = vmatprep.subr.mxu0 0.0
        %664 = vmatpush1.msra.mxu0 0.0
        %665 = vmatprep.mubr.f32.mxu0 0.0
        %666 = vmatmul.mubr.f32.gmra.mrb[0].mxu0 %v594
        %v667 = vpop.f32.mrb[0].mxu0
        %v668 = vadd.f32 0.0, %v667
        %v669 = vpop.f32.mrb[0].mxu0
        %670 = vdwg.mxu0
        %v671 = vadd.f32 %v600, %v668
        %v672 = vtanh.pop %v671
        %s673 = scalar_lea.vmem %s248, %s598 [#allocation4]
        %674 = vst [vmem:[%s673] sm:$0xff] %v672
        %s675 = scalar_select %p284, 5, 2
        %s676 = smul.u32 %s675, 8
        %s677 = scalar_lea.vmem %s226, %s676 [#allocation3]
        %v678 = vld [vmem:[%s677] sm:$0xff]
        %679 = vmatprep.subr.mxu0 0.0
        %680 = vmatpush1.msra.mxu0 %v267
        %681 = vmatprep.subr.mxu0 0.0
        %682 = vmatpush1.msra.mxu0 %v268
        %683 = vmatprep.subr.mxu0 0.0
        %684 = vmatpush1.msra.mxu0 %v269
        %685 = vmatprep.subr.mxu0 0.0
        %686 = vmatpush1.msra.mxu0 %v270
        %687 = vmatprep.subr.mxu0 0.0
        %688 = vmatpush1.msra.mxu0 %v271
        %689 = vmatprep.subr.mxu0 0.0
        %690 = vmatpush1.msra.mxu0 %v272
        %691 = vmatprep.subr.mxu0 0.0
        %692 = vmatpush1.msra.mxu0 %v273
        %693 = vmatprep.subr.mxu0 0.0
        %694 = vmatpush1.msra.mxu0 %v274
        %695 = vmatprep.subr.mxu0 0.0
        %696 = vmatpush1.msra.mxu0 %v275
        %697 = vmatprep.subr.mxu0 0.0
        %698 = vmatpush1.msra.mxu0 %v276
        %699 = vmatprep.subr.mxu0 0.0
        %700 = vmatpush1.msra.mxu0 %v277
        %701 = vmatprep.subr.mxu0 0.0
        %702 = vmatpush1.msra.mxu0 %v278
        %703 = vmatprep.subr.mxu0 0.0
        %704 = vmatpush1.msra.mxu0 %v279
        %705 = vmatprep.subr.mxu0 0.0
        %706 = vmatpush1.msra.mxu0 %v280
        %707 = vmatprep.subr.mxu0 0.0
        %708 = vmatpush1.msra.mxu0 %v281
        %709 = vmatprep.subr.mxu0 0.0
        %710 = vmatpush1.msra.mxu0 %v282
        %711 = vmatprep.subr.mxu0 0.0
        %712 = vmatpush1.msra.mxu0 0.0
        %713 = vmatprep.subr.mxu0 0.0
        %714 = vmatpush1.msra.mxu0 0.0
        %715 = vmatprep.subr.mxu0 0.0
        %716 = vmatpush1.msra.mxu0 0.0
        %717 = vmatprep.subr.mxu0 0.0
        %718 = vmatpush1.msra.mxu0 0.0
        %719 = vmatprep.subr.mxu0 0.0
        %720 = vmatpush1.msra.mxu0 0.0
        %721 = vmatprep.subr.mxu0 0.0
        %722 = vmatpush1.msra.mxu0 0.0
        %723 = vmatprep.subr.mxu0 0.0
        %724 = vmatpush1.msra.mxu0 0.0
        %725 = vmatprep.subr.mxu0 0.0
        %726 = vmatpush1.msra.mxu0 0.0
        %727 = vmatprep.subr.mxu0 0.0
        %728 = vmatpush1.msra.mxu0 0.0
        %729 = vmatprep.subr.mxu0 0.0
        %730 = vmatpush1.msra.mxu0 0.0
        %731 = vmatprep.subr.mxu0 0.0
        %732 = vmatpush1.msra.mxu0 0.0
        %733 = vmatprep.subr.mxu0 0.0
        %734 = vmatpush1.msra.mxu0 0.0
        %735 = vmatprep.subr.mxu0 0.0
        %736 = vmatpush1.msra.mxu0 0.0
        %737 = vmatprep.subr.mxu0 0.0
        %738 = vmatpush1.msra.mxu0 0.0
        %739 = vmatprep.subr.mxu0 0.0
        %740 = vmatpush1.msra.mxu0 0.0
        %741 = vmatprep.subr.mxu0 0.0
        %742 = vmatpush1.msra.mxu0 0.0
        %743 = vmatprep.mubr.f32.mxu0 0.0
        %744 = vmatmul.mubr.f32.gmra.mrb[0].mxu0 %v672
        %v745 = vpop.f32.mrb[0].mxu0
        %v746 = vadd.f32 0.0, %v745
        %v747 = vpop.f32.mrb[0].mxu0
        %748 = vdwg.mxu0
        %v749 = vadd.f32 %v678, %v746
        %v750 = vtanh.pop %v749
        %s751 = scalar_lea.vmem %s248, %s676 [#allocation4]
        %752 = vst [vmem:[%s751] sm:$0xff] %v750
        %s753 = scalar_select %p284, 6, 1
        %s754 = smul.u32 %s753, 8
        %s755 = scalar_lea.vmem %s226, %s754 [#allocation3]
        %v756 = vld [vmem:[%s755] sm:$0xff]
        %757 = vmatprep.subr.mxu0 0.0
        %758 = vmatpush1.msra.mxu0 %v267
        %759 = vmatprep.subr.mxu0 0.0
        %760 = vmatpush1.msra.mxu0 %v268
        %761 = vmatprep.subr.mxu0 0.0
        %762 = vmatpush1.msra.mxu0 %v269
        %763 = vmatprep.subr.mxu0 0.0
        %764 = vmatpush1.msra.mxu0 %v270
        %765 = vmatprep.subr.mxu0 0.0
        %766 = vmatpush1.msra.mxu0 %v271
        %767 = vmatprep.subr.mxu0 0.0
        %768 = vmatpush1.msra.mxu0 %v272
        %769 = vmatprep.subr.mxu0 0.0
        %770 = vmatpush1.msra.mxu0 %v273
        %771 = vmatprep.subr.mxu0 0.0
        %772 = vmatpush1.msra.mxu0 %v274
        %773 = vmatprep.subr.mxu0 0.0
        %774 = vmatpush1.msra.mxu0 %v275
        %775 = vmatprep.subr.mxu0 0.0
        %776 = vmatpush1.msra.mxu0 %v276
        %777 = vmatprep.subr.mxu0 0.0
        %778 = vmatpush1.msra.mxu0 %v277
        %779 = vmatprep.subr.mxu0 0.0
        %780 = vmatpush1.msra.mxu0 %v278
        %781 = vmatprep.subr.mxu0 0.0
        %782 = vmatpush1.msra.mxu0 %v279
        %783 = vmatprep.subr.mxu0 0.0
        %784 = vmatpush1.msra.mxu0 %v280
        %785 = vmatprep.subr.mxu0 0.0
        %786 = vmatpush1.msra.mxu0 %v281
        %787 = vmatprep.subr.mxu0 0.0
        %788 = vmatpush1.msra.mxu0 %v282
        %789 = vmatprep.subr.mxu0 0.0
        %790 = vmatpush1.msra.mxu0 0.0
        %791 = vmatprep.subr.mxu0 0.0
        %792 = vmatpush1.msra.mxu0 0.0
        %793 = vmatprep.subr.mxu0 0.0
        %794 = vmatpush1.msra.mxu0 0.0
        %795 = vmatprep.subr.mxu0 0.0
        %796 = vmatpush1.msra.mxu0 0.0
        %797 = vmatprep.subr.mxu0 0.0
        %798 = vmatpush1.msra.mxu0 0.0
        %799 = vmatprep.subr.mxu0 0.0
        %800 = vmatpush1.msra.mxu0 0.0
        %801 = vmatprep.subr.mxu0 0.0
        %802 = vmatpush1.msra.mxu0 0.0
        %803 = vmatprep.subr.mxu0 0.0
        %804 = vmatpush1.msra.mxu0 0.0
        %805 = vmatprep.subr.mxu0 0.0
        %806 = vmatpush1.msra.mxu0 0.0
        %807 = vmatprep.subr.mxu0 0.0
        %808 = vmatpush1.msra.mxu0 0.0
        %809 = vmatprep.subr.mxu0 0.0
        %810 = vmatpush1.msra.mxu0 0.0
        %811 = vmatprep.subr.mxu0 0.0
        %812 = vmatpush1.msra.mxu0 0.0
        %813 = vmatprep.subr.mxu0 0.0
        %814 = vmatpush1.msra.mxu0 0.0
        %815 = vmatprep.subr.mxu0 0.0
        %816 = vmatpush1.msra.mxu0 0.0
        %817 = vmatprep.subr.mxu0 0.0
        %818 = vmatpush1.msra.mxu0 0.0
        %819 = vmatprep.subr.mxu0 0.0
        %820 = vmatpush1.msra.mxu0 0.0
        %821 = vmatprep.mubr.f32.mxu0 0.0
        %822 = vmatmul.mubr.f32.gmra.mrb[0].mxu0 %v750
        %v823 = vpop.f32.mrb[0].mxu0
        %v824 = vadd.f32 0.0, %v823
        %v825 = vpop.f32.mrb[0].mxu0
        %826 = vdwg.mxu0
        %v827 = vadd.f32 %v756, %v824
        %v828 = vtanh.pop %v827
        %s829 = scalar_lea.vmem %s248, %s754 [#allocation4]
        %830 = vst [vmem:[%s829] sm:$0xff] %v828
        %s831 = scalar_select %p284, 7, 0
        %s832 = smul.u32 %s831, 8
        %s833 = scalar_lea.vmem %s226, %s832 [#allocation3]
        %v834 = vld [vmem:[%s833] sm:$0xff]
        %835 = vmatprep.subr.mxu0 0.0
        %836 = vmatpush1.msra.mxu0 %v267
        %837 = vmatprep.subr.mxu0 0.0
        %838 = vmatpush1.msra.mxu0 %v268
        %839 = vmatprep.subr.mxu0 0.0
        %840 = vmatpush1.msra.mxu0 %v269
        %841 = vmatprep.subr.mxu0 0.0
        %842 = vmatpush1.msra.mxu0 %v270
        %843 = vmatprep.subr.mxu0 0.0
        %844 = vmatpush1.msra.mxu0 %v271
        %845 = vmatprep.subr.mxu0 0.0
        %846 = vmatpush1.msra.mxu0 %v272
        %847 = vmatprep.subr.mxu0 0.0
        %848 = vmatpush1.msra.mxu0 %v273
        %849 = vmatprep.subr.mxu0 0.0
        %850 = vmatpush1.msra.mxu0 %v274
        %851 = vmatprep.subr.mxu0 0.0
        %852 = vmatpush1.msra.mxu0 %v275
        %853 = vmatprep.subr.mxu0 0.0
        %854 = vmatpush1.msra.mxu0 %v276
        %855 = vmatprep.subr.mxu0 0.0
        %856 = vmatpush1.msra.mxu0 %v277
        %857 = vmatprep.subr.mxu0 0.0
        %858 = vmatpush1.msra.mxu0 %v278
        %859 = vmatprep.subr.mxu0 0.0
        %860 = vmatpush1.msra.mxu0 %v279
        %861 = vmatprep.subr.mxu0 0.0
        %862 = vmatpush1.msra.mxu0 %v280
        %863 = vmatprep.subr.mxu0 0.0
        %864 = vmatpush1.msra.mxu0 %v281
        %865 = vmatprep.subr.mxu0 0.0
        %866 = vmatpush1.msra.mxu0 %v282
        %867 = vmatprep.subr.mxu0 0.0
        %868 = vmatpush1.msra.mxu0 0.0
        %869 = vmatprep.subr.mxu0 0.0
        %870 = vmatpush1.msra.mxu0 0.0
        %871 = vmatprep.subr.mxu0 0.0
        %872 = vmatpush1.msra.mxu0 0.0
        %873 = vmatprep.subr.mxu0 0.0
        %874 = vmatpush1.msra.mxu0 0.0
        %875 = vmatprep.subr.mxu0 0.0
        %876 = vmatpush1.msra.mxu0 0.0
        %877 = vmatprep.subr.mxu0 0.0
        %878 = vmatpush1.msra.mxu0 0.0
        %879 = vmatprep.subr.mxu0 0.0
        %880 = vmatpush1.msra.mxu0 0.0
        %881 = vmatprep.subr.mxu0 0.0
        %882 = vmatpush1.msra.mxu0 0.0
        %883 = vmatprep.subr.mxu0 0.0
        %884 = vmatpush1.msra.mxu0 0.0
        %885 = vmatprep.subr.mxu0 0.0
        %886 = vmatpush1.msra.mxu0 0.0
        %887 = vmatprep.subr.mxu0 0.0
        %888 = vmatpush1.msra.mxu0 0.0
        %889 = vmatprep.subr.mxu0 0.0
        %890 = vmatpush1.msra.mxu0 0.0
        %891 = vmatprep.subr.mxu0 0.0
        %892 = vmatpush1.msra.mxu0 0.0
        %893 = vmatprep.subr.mxu0 0.0
        %894 = vmatpush1.msra.mxu0 0.0
        %895 = vmatprep.subr.mxu0 0.0
        %896 = vmatpush1.msra.mxu0 0.0
        %897 = vmatprep.subr.mxu0 0.0
        %898 = vmatpush1.msra.mxu0 0.0
        %899 = vmatprep.mubr.f32.mxu0 0.0
        %900 = vmatmul.mubr.f32.gmra.mrb[0].mxu0 %v828
        %v901 = vpop.f32.mrb[0].mxu0
        %v902 = vadd.f32 0.0, %v901
        %v903 = vpop.f32.mrb[0].mxu0
        %904 = vdwg.mxu0
        %v905 = vadd.f32 %v834, %v902
        %v906 = vtanh.pop %v905
        %s907 = scalar_lea.vmem %s248, %s832 [#allocation4]
        %908 = vst [vmem:[%s907] sm:$0xff] %v906
        %909 = vst [vmem:[#allocation2] sm:$0xff] %v906
        %s910 = sand.u32 %s101, 1
        %s911 = sand.u32 %s101, 1
        %s912 = smul.addr %s911, 64
        %s913 = scalar_lea.vmem [#allocation4], %s912
        // Predicated region
        $region71: #{birnn_forward.5} parent=61 // pred_check
          %p914 = pneg %p111
        $region72: #{birnn_forward.5} parent=61 // pred_check_branch
          %916 = sbr.rel (%p914) target = $region74
        $region73: #{birnn_forward.5} parent=61 // pred_region
          %s917 = smul.u32 %s17, 2
          %s918 = ssub.s32 1, %s917
          %s919 = smul.u32 %s918, %s18
          %s920 = smul.u32 8, %s919
          %s921 = smul.addr %s920, 2
          %s922 = sadd.s32 %s17, %s921
          %s923 = smul.addr %s922, 8
          %s924 = scalar_lea.vmem %s2, %s923
          // Predicated region
          $region75: #{birnn_forward.5} parent=73 // pred_check
            _
          $region76: #{birnn_forward.5} parent=73 // pred_check_branch
            %926 = sbr.rel (0) target = $region78
          $region77: #{birnn_forward.5} parent=73 // pred_region
            // Predicated region
            $region79: #{birnn_forward.5} parent=77 // pred_check
              _
            $region80: #{birnn_forward.5} parent=77 // pred_check_branch
              %928 = sbr.rel (0) target = $region82
            $region81: #{birnn_forward.5} parent=77 // pred_region
              // Predicated region
              $region94: #{birnn_forward.5} parent=81 // pred_check
                _
              $region95: #{birnn_forward.5} parent=81 // pred_check_branch
                %957 = sbr.rel (0) target = $region97
              $region96: #{birnn_forward.5} parent=81 // pred_region
                loop: start=0, step=1, limit=1
                $region98: #{birnn_forward.5} parent=96 // loop_pre_header
                  _
                $region99: #{birnn_forward.5} parent=96 // loop_header
                  %s959 = sphi 0, %s963
                  %p960 = scmp.ge.s32.totalorder %s959, 1
                  %s964 = sphi %s913, %s913
                  %s965 = sphi %s924, %s924
                $region100: #{birnn_forward.5} parent=96 // loop_header_branch
                  %962 = sbr.rel (%p960) target = $region104
                $region101: #{birnn_forward.5} parent=96 // loop_body
                  %v966 = vld [vmem:[%s964] sm:$0xff]
                  %967 = vst [vmem:[%s965] sm:$0xff] %v966
                  %v968 = vld [vmem:[%s964 + $0x8] sm:$0xff]
                  %969 = vst [vmem:[%s965 + $0x10] sm:$0xff] %v968
                  %v970 = vld [vmem:[%s964 + $0x10] sm:$0xff]
                  %971 = vst [vmem:[%s965 + $0x20] sm:$0xff] %v970
                  %v972 = vld [vmem:[%s964 + $0x18] sm:$0xff]
                  %973 = vst [vmem:[%s965 + $0x30] sm:$0xff] %v972
                  %v974 = vld [vmem:[%s964 + $0x20] sm:$0xff]
                  %975 = vst [vmem:[%s965 + $0x40] sm:$0xff] %v974
                  %v976 = vld [vmem:[%s964 + $0x28] sm:$0xff]
                  %977 = vst [vmem:[%s965 + $0x50] sm:$0xff] %v976
                  %v978 = vld [vmem:[%s964 + $0x30] sm:$0xff]
                  %979 = vst [vmem:[%s965 + $0x60] sm:$0xff] %v978
                  %v980 = vld [vmem:[%s964 + $0x38] sm:$0xff]
                  %981 = vst [vmem:[%s965 + $0x70] sm:$0xff] %v980
                $region102: #{birnn_forward.5} parent=96 // loop_footer
                  %s963 = sadd.s32 1, %s959
                $region103: #{birnn_forward.5} parent=96 // loop_footer_branch
                  %958 = sbr.rel target = $region99
                $region104: #{birnn_forward.5} parent=96 // loop_exit
                  _
              $region97: #{birnn_forward.5} parent=81 // pred_fallthru
                _
              // Predicated region
              $region105: #{birnn_forward.5} parent=81 // pred_check
                _
              $region106: #{birnn_forward.5} parent=81 // pred_check_branch
                %983 = sbr.rel target = $region108
              $region107: #{birnn_forward.5} parent=81 // pred_region
                _
              $region108: #{birnn_forward.5} parent=81 // pred_fallthru
                _
            $region82: #{birnn_forward.5} parent=77 // pred_fallthru
              _
            // Predicated region
            $region83: #{birnn_forward.5} parent=77 // pred_check
              _
            $region84: #{birnn_forward.5} parent=77 // pred_check_branch
              %930 = sbr.rel target = $region86
            $region85: #{birnn_forward.5} parent=77 // pred_region
              loop: start=0, step=1, limit=1
              $region87: #{birnn_forward.5} parent=85 // loop_pre_header
                _
              $region88: #{birnn_forward.5} parent=85 // loop_header
                %s933 = sphi 0, %s937
                %p934 = scmp.ge.s32.totalorder %s933, 1
                %s938 = sphi %s913, %s913
                %s939 = sphi %s924, %s924
              $region89: #{birnn_forward.5} parent=85 // loop_header_branch
                %936 = sbr.rel (%p934) target = $region93
              $region90: #{birnn_forward.5} parent=85 // loop_body
                %v940 = vld [vmem:[%s938] sm:$0xff]
                %941 = vst [vmem:[%s939] sm:$0xff] %v940
                %v942 = vld [vmem:[%s938 + $0x8] sm:$0xff]
                %943 = vst [vmem:[%s939 + $0x10] sm:$0xff] %v942
                %v944 = vld [vmem:[%s938 + $0x10] sm:$0xff]
                %945 = vst [vmem:[%s939 + $0x20] sm:$0xff] %v944
                %v946 = vld [vmem:[%s938 + $0x18] sm:$0xff]
                %947 = vst [vmem:[%s939 + $0x30] sm:$0xff] %v946
                %v948 = vld [vmem:[%s938 + $0x20] sm:$0xff]
                %949 = vst [vmem:[%s939 + $0x40] sm:$0xff] %v948
                %v950 = vld [vmem:[%s938 + $0x28] sm:$0xff]
                %951 = vst [vmem:[%s939 + $0x50] sm:$0xff] %v950
                %v952 = vld [vmem:[%s938 + $0x30] sm:$0xff]
                %953 = vst [vmem:[%s939 + $0x60] sm:$0xff] %v952
                %v954 = vld [vmem:[%s938 + $0x38] sm:$0xff]
                %955 = vst [vmem:[%s939 + $0x70] sm:$0xff] %v954
              $region91: #{birnn_forward.5} parent=85 // loop_footer
                %s937 = sadd.s32 1, %s933
              $region92: #{birnn_forward.5} parent=85 // loop_footer_branch
                %932 = sbr.rel target = $region88
              $region93: #{birnn_forward.5} parent=85 // loop_exit
                _
            $region86: #{birnn_forward.5} parent=77 // pred_fallthru
              _
          $region78: #{birnn_forward.5} parent=73 // pred_fallthru
            _
          %984 = vnop
        $region74: #{birnn_forward.5} parent=61 // pred_fallthru
          _
      $region62: #{birnn_forward.5} parent=5 // pred_fallthru
        _
      %p985 = scmp.le.s32.totalorder 2, %s8
      // Predicated region
      $region109: #{birnn_forward.5} parent=5 // pred_check
        %p986 = pneg %p985
      $region110: #{birnn_forward.5} parent=5 // pred_check_branch
        %988 = sbr.rel (%p986) target = $region112
      $region111: #{birnn_forward.5} parent=5 // pred_region
        %s989 = ssub.s32 %s8, 2
        // Predicated region
        $region113: #{birnn_forward.5} parent=111 // pred_check
          %p990 = pneg %p117
        $region114: #{birnn_forward.5} parent=111 // pred_check_branch
          %992 = sbr.rel (%p990) target = $region116
        $region115: #{birnn_forward.5} parent=111 // pred_region
          %s993 = sand.u32 %s102, 1
          %s994 = sand.u32 %s102, 1
          %s995 = smul.addr %s994, 64
          %s996 = scalar_lea.vmem [#allocation4], %s995
        $region116: #{birnn_forward.5} parent=111 // pred_fallthru
          _
      $region112: #{birnn_forward.5} parent=5 // pred_fallthru
        _
    $region6: #{birnn_forward.5} parent=1 // loop_footer
      %s12 = sadd.s32 1, %s8
    $region7: #{birnn_forward.5} parent=1 // loop_footer_branch
      %7 = sbr.rel target = $region3
    $region8: #{birnn_forward.5} parent=1 // loop_exit
      _

</llo_original>
